<compile_context>
chip_gen: v6e
topology: v6e:2x2x1
jax: 0.10.0
libtpu: 0.0.40
codegen_flags: <defaults>
</compile_context>

<pallas_src>
import math

import jax
import jax.numpy as jnp
from jax import lax
from jax.experimental import pallas as pl
from jax.experimental.pallas import tpu as pltpu

NUM_CLASSES = 17
NPAD = 128          # lane-dense padded fc output width (sliced back to 17 outside)


def _height_schedule(L):
    """Static (H_in, H_out) pairs for the repeated `_block`; asserts final H == 1."""
    assert L >= 3, "sequence length too small for conv_region"
    H = L - 2
    sched = []
    while H > 2:
        Hp = (H - 2) // 2 + 1            # MaxPool2d((3,1), stride=2) on padding2(x)
        sched.append((H, Hp))
        H = Hp
    assert H == 1, (
        f"DPCNN pyramid for L={L} ends at height {H}; the original module's "
        "double squeeze + Linear requires the final height to be 1")
    return sched


def _pick_batch_tile(B, cap=64):
    """Largest divisor of B that still leaves >= 2 grid programs (v7x: 2 TCs)."""
    if B <= 1:
        return 1
    bt = max(1, min(B // 2, cap))
    while B % bt:
        bt -= 1
    return bt


def _make_kernel(Bt, L, E, F, sched):
    M = Bt * L          # rows per pyramid-conv matmul (all batch elements at once)
    M0 = M - 2          # conv_region output rows
    H0 = L - 2          # activation height after conv_region

    def kernel(x_ref, wri_ref, br_ref, wci_ref, bc_ref, wf_ref, bf_ref,
               out_ref, act_ref, px_ref):
        # ---- hoisted constants (JAX does not CSE broadcast_in_dim) ----
        bc_full = jnp.broadcast_to(bc_ref[...], (M, F))
        # segment position of buffer row r+1 (the write target of conv output row r)
        pos = (lax.broadcasted_iota(jnp.int32, (M, F), 0) + 1) % L

        def masked(out, H):
            # keep data rows (segment pos 1..H), zero the border / stale rows
            return jnp.where((pos >= 1) & (pos <= H), out, 0.0)

        def conv():
            """pad1 -> relu -> conv as one im2col matmul over every segment."""
            full = jnp.maximum(act_ref[pl.ds(0, M + 2), :], 0.0)
            slab = jnp.concatenate([full[0:M], full[1:M + 1], full[2:M + 2]],
                                   axis=1)                       # [M, 3F]
            return jnp.dot(slab, wci_ref[...],
                           preferred_element_type=jnp.float32) + bc_full

        # zero the zero-bordered activation buffer once per program
        act_ref[...] = jnp.zeros_like(act_ref)

        # ---- conv_region (valid conv on the raw embeddings) ----
        xf = x_ref[0]                                            # [Bt*L, E]
        slab0 = jnp.concatenate([xf[0:M0], xf[1:M0 + 1], xf[2:M0 + 2]], axis=1)
        out0 = jnp.dot(slab0, wri_ref[...], preferred_element_type=jnp.float32)
        out0 = out0 + jnp.broadcast_to(br_ref[...], (M0, F))
        pos0 = (lax.broadcasted_iota(jnp.int32, (M0, F), 0) + 1) % L
        mask0 = (pos0 >= 1) & (pos0 <= H0)
        act_ref[pl.ds(1, M0), :] = jnp.where(mask0, out0, 0.0)

        # ---- two initial pad1 -> relu -> conv stages ----
        act_ref[pl.ds(1, M), :] = masked(conv(), H0)
        act_ref[pl.ds(1, M), :] = masked(conv(), H0)

        # ---- repeated `_block` pyramid (unrolled; heights are static) ----
        for (H, Hp) in sched:
            # px = max_pool(padding2(x)): 3 strided reads per batch element
            pooled = []
            for b in range(Bt):
                s = b * L + 1
                w0 = act_ref[pl.ds(s + 0, Hp, stride=2), :]
                w1 = act_ref[pl.ds(s + 1, Hp, stride=2), :]
                w2 = act_ref[pl.ds(s + 2, Hp, stride=2), :]
                pooled.append(jnp.maximum(jnp.maximum(w0, w1), w2))
            # rebuild the zero-bordered segment layout, now holding px
            act_ref[...] = jnp.zeros_like(act_ref)
            for b in range(Bt):
                act_ref[pl.ds(b * L + 1, Hp), :] = pooled[b]
            px_ref[...] = act_ref[...]
            # two conv stages, then the residual add against px (full width)
            act_ref[pl.ds(1, M), :] = masked(conv(), Hp)
            act_ref[pl.ds(1, M), :] = masked(conv(), Hp) + px_ref[pl.ds(1, M), :]

        # ---- final Linear: one lane-dense [Bt, NPAD] store per program ----
        feat = act_ref[pl.ds(1, Bt, stride=L), :]                # [Bt, F]
        logits = jnp.dot(feat, wf_ref[...], preferred_element_type=jnp.float32)
        out_ref[0] = logits + jnp.broadcast_to(bf_ref[...], (Bt, NPAD))

    return kernel


def dpcnn_forward(x_emb, wr, br, wc, bc, wf, bf, *, batch_tile=None):
    """x_emb: [B, L, E]; wr: [3, E, F]; wc: [3, F, F]; br/bc: [1, F];
    wf: [F, 17]; bf: [1, 17].  Returns [B, 17] logits."""
    B, L, E = x_emb.shape
    F = wr.shape[2]
    sched = _height_schedule(L)

    Bt = batch_tile if batch_tile is not None else _pick_batch_tile(B)
    assert B % Bt == 0, "batch must be divisible by the batch tile"
    n_prog = B // Bt

    # im2col weights / lane-dense padded fc parameters
    wri = wr.reshape(3 * E, F)
    wci = wc.reshape(3 * F, F)
    wf_pad = jnp.zeros((F, NPAD), wf.dtype).at[:, :NUM_CLASSES].set(wf)
    bf_pad = jnp.zeros((1, NPAD), bf.dtype).at[:, :NUM_CLASSES].set(bf)
    x_flat = x_emb.reshape(n_prog, Bt * L, E)

    kernel = _make_kernel(Bt, L, E, F, sched)

    # advisory cost estimate for the XLA scheduler
    n_conv = 2 + 2 * len(sched)
    M, M0 = Bt * L, Bt * L - 2
    flops = n_prog * (2 * M0 * (3 * E) * F + n_conv * 2 * M * (3 * F) * F
                      + 2 * Bt * F * NPAD)
    bytes_accessed = 4 * (x_flat.size + n_prog * Bt * NPAD + wri.size + wci.size
                          + wf_pad.size + br.size + bc.size + bf_pad.size)
    cost = pl.CostEstimate(flops=int(flops), transcendentals=0,
                           bytes_accessed=int(bytes_accessed))

    out = pl.pallas_call(
        kernel,
        out_shape=jax.ShapeDtypeStruct((n_prog, Bt, NPAD), jnp.float32),
        grid=(n_prog,),
        in_specs=[
            pl.BlockSpec((1, Bt * L, E), lambda g: (g, 0, 0)),   # embedded tokens
            pl.BlockSpec((3 * E, F), lambda g: (0, 0)),          # conv_region W (im2col)
            pl.BlockSpec((1, F), lambda g: (0, 0)),              # conv_region bias
            pl.BlockSpec((3 * F, F), lambda g: (0, 0)),          # conv W (im2col)
            pl.BlockSpec((1, F), lambda g: (0, 0)),              # conv bias
            pl.BlockSpec((F, NPAD), lambda g: (0, 0)),           # fc W (lane-padded)
            pl.BlockSpec((1, NPAD), lambda g: (0, 0)),           # fc bias (lane-padded)
        ],
        out_specs=pl.BlockSpec((1, Bt, NPAD), lambda g: (g, 0, 0)),
        scratch_shapes=[
            pltpu.VMEM((Bt * L + 8, F), jnp.float32),            # activation buffer
            pltpu.VMEM((Bt * L + 8, F), jnp.float32),            # pooled (px) buffer
        ],
        compiler_params=pltpu.CompilerParams(
            dimension_semantics=("parallel",),
            vmem_limit_bytes=32 * 1024 * 1024,
        ),
        cost_estimate=cost,
    )(x_flat, wri, br, wci, bc, wf_pad, bf_pad)

    return out.reshape(B, NPAD)[:, :NUM_CLASSES]


def dpcnn_ref(x_emb, wr, br, wc, bc, wf, bf):
    """Pure-JAX reference mirroring the PyTorch forward, for correctness check."""
    def conv3(x, w, b):
        ho = x.shape[0] - 2
        return x[0:ho] @ w[0] + x[1:ho + 1] @ w[1] + x[2:ho + 2] @ w[2] + b

    def pad(x, t, bo):
        return jnp.pad(x, ((t, bo), (0, 0)))

    outs = []
    for bi in range(x_emb.shape[0]):
        h = conv3(x_emb[bi], wr, br[0])
        h = conv3(pad(jnp.maximum(h, 0.0), 1, 1), wc, bc[0])
        h = conv3(pad(jnp.maximum(h, 0.0), 1, 1), wc, bc[0])
        H = h.shape[0]
        while H > 2:
            xp = pad(h, 0, 1)
            Hp = (H - 2) // 2 + 1
            px = jnp.stack([jnp.max(xp[2 * i:2 * i + 3], axis=0) for i in range(Hp)],
                           axis=0)
            h = conv3(pad(jnp.maximum(px, 0.0), 1, 1), wc, bc[0])
            h = conv3(pad(jnp.maximum(h, 0.0), 1, 1), wc, bc[0])
            h = h + px
            H = Hp
        outs.append(h[0] @ wf + bf[0])
    return jnp.stack(outs)


if __name__ == "__main__":
    # Small shapes consistent with the module: batch B=4, seq-len L=16
    # (heights 14 -> 7 -> 3 -> 1 through the pyramid), embedding_size E=32,
    # num_filters F=32, vocab V=100 (+1 padding row), 17 classes.
    B, L, E, Fdim, V = 4, 16, 32, 32, 100
    key = jax.random.PRNGKey(0)
    ks = jax.random.split(key, 6)

    # Deterministic synthetic parameters (kaiming-normal-like for dim>1, zeros for biases).
    emb_table = jax.random.normal(ks[0], (V + 1, E), jnp.float32)
    wr = jax.random.normal(ks[1], (3, E, Fdim), jnp.float32) * math.sqrt(2.0 / (3 * E))
    wc = jax.random.normal(ks[2], (3, Fdim, Fdim), jnp.float32) * math.sqrt(2.0 / (3 * Fdim))
    wf = jax.random.normal(ks[3], (Fdim, NUM_CLASSES), jnp.float32) * math.sqrt(2.0 / Fdim)
    br = jnp.zeros((1, Fdim), jnp.float32)
    bc = jnp.zeros((1, Fdim), jnp.float32)
    bf = jnp.zeros((1, NUM_CLASSES), jnp.float32)

    tokens = jax.random.randint(ks[4], (B, L), 0, V)

    # Glue: embedding lookup (gather) and SpatialDropout (identity at inference).
    # TODO(synk): training-mode SpatialDropout (random channel dropping) not implemented.
    x_emb = jnp.take(emb_table, tokens, axis=0).astype(jnp.float32)          # [B, L, E]

    out = jax.block_until_ready(dpcnn_forward(x_emb, wr, br, wc, bc, wf, bf))
    ref = dpcnn_ref(x_emb, wr, br, wc, bc, wf, bf)

    assert out.shape == (B, NUM_CLASSES)
    assert jnp.allclose(out, ref, atol=1e-3, rtol=1e-3), "mismatch vs JAX reference"
    print("KERNEL_OK")
</pallas_src>

<mosaic_0001>
module attributes {stable_mosaic.version = 11 : i64} {
  func.func @kernel(%arg0: i32, %arg1: memref<1x32x32xf32, #tpu.memory_space<vmem>>, %arg2: memref<96x32xf32, #tpu.memory_space<vmem>>, %arg3: memref<1x32xf32, #tpu.memory_space<vmem>>, %arg4: memref<96x32xf32, #tpu.memory_space<vmem>>, %arg5: memref<1x32xf32, #tpu.memory_space<vmem>>, %arg6: memref<32x128xf32, #tpu.memory_space<vmem>>, %arg7: memref<1x128xf32, #tpu.memory_space<vmem>>, %arg8: memref<1x2x128xf32, #tpu.memory_space<vmem>>, %arg9: memref<40x32xf32, #tpu.memory_space<vmem>>, %arg10: memref<40x32xf32, #tpu.memory_space<vmem>>) attributes {dimension_semantics = [#tpu.dimension_semantics<parallel>], iteration_bounds = array<i64: 2>, scalar_prefetch = 0 : i64, scratch_operands = 2 : i64, tpu.core_type = #tpu.core_type<tc>, window_params = [{transform_indices = @transform_0, window_bounds = array<i64: 1, 32, 32>}, {pipeline_mode = #tpu.pipeline_mode<synchronous>, transform_indices = @transform_1, window_bounds = array<i64: 96, 32>}, {pipeline_mode = #tpu.pipeline_mode<synchronous>, transform_indices = @transform_2, window_bounds = array<i64: 1, 32>}, {pipeline_mode = #tpu.pipeline_mode<synchronous>, transform_indices = @transform_3, window_bounds = array<i64: 96, 32>}, {pipeline_mode = #tpu.pipeline_mode<synchronous>, transform_indices = @transform_4, window_bounds = array<i64: 1, 32>}, {pipeline_mode = #tpu.pipeline_mode<synchronous>, transform_indices = @transform_5, window_bounds = array<i64: 32, 128>}, {pipeline_mode = #tpu.pipeline_mode<synchronous>, transform_indices = @transform_6, window_bounds = array<i64: 1, 128>}, {transform_indices = @transform_7, window_bounds = array<i64: 1, 2, 128>}]} {
    %c0 = arith.constant 0 : index
    %c0_0 = arith.constant 0 : index
    %0 = vector.load %arg5[%c0, %c0_0] : memref<1x32xf32, #tpu.memory_space<vmem>>, vector<1x32xf32>
    %1 = vector.shape_cast %0 : vector<1x32xf32> to vector<1x32xf32>
    %2 = vector.broadcast %1 : vector<1x32xf32> to vector<32x32xf32>
    %3 = tpu.iota {dimensions = array<i32: 0>} : vector<32x32xi32>
    %c1_i32 = arith.constant 1 : i32
    %4 = vector.broadcast %c1_i32 : i32 to vector<32x32xi32>
    %5 = arith.addi %3, %4 : vector<32x32xi32>
    %c16_i32 = arith.constant 16 : i32
    %c0_i32 = arith.constant 0 : i32
    %6 = arith.cmpi eq, %c16_i32, %c0_i32 : i32
    %c1_i32_1 = arith.constant 1 : i32
    %7 = arith.select %6, %c1_i32_1, %c16_i32 : i32
    %8 = vector.broadcast %7 : i32 to vector<32x32xi32>
    %9 = arith.remsi %5, %8 : vector<32x32xi32>
    %c0_i32_2 = arith.constant 0 : i32
    %10 = vector.broadcast %c0_i32_2 : i32 to vector<32x32xi32>
    %11 = arith.cmpi ne, %9, %10 : vector<32x32xi32>
    %c0_i32_3 = arith.constant 0 : i32
    %12 = vector.broadcast %c0_i32_3 : i32 to vector<32x32xi32>
    %13 = arith.cmpi slt, %9, %12 : vector<32x32xi32>
    %c0_i32_4 = arith.constant 0 : i32
    %14 = arith.cmpi slt, %7, %c0_i32_4 : i32
    %15 = vector.broadcast %14 : i1 to vector<32x32xi1>
    %16 = vector.broadcast %15 : vector<32x32xi1> to vector<32x32xi1>
    %17 = arith.xori %13, %16 : vector<32x32xi1>
    %18 = arith.andi %17, %11 : vector<32x32xi1>
    %19 = vector.broadcast %7 : i32 to vector<32x32xi32>
    %20 = arith.addi %9, %19 : vector<32x32xi32>
    %21 = arith.select %18, %20, %9 : vector<32x32xi1>, vector<32x32xi32>
    %cst = arith.constant 0.000000e+00 : f32
    %22 = vector.broadcast %cst : f32 to vector<40x32xf32>
    %c0_5 = arith.constant 0 : index
    %c0_6 = arith.constant 0 : index
    %23 = vector.load %arg9[%c0_5, %c0_6] : memref<40x32xf32, #tpu.memory_space<vmem>>, vector<40x32xf32>
    tpu.vector_store %arg9[%c0_5, %c0_6], %22 {strides = array<i32>} : memref<40x32xf32, #tpu.memory_space<vmem>>, vector<40x32xf32>,
    %c0_7 = arith.constant 0 : index
    %c0_8 = arith.constant 0 : index
    %c0_9 = arith.constant 0 : index
    %24 = vector.load %arg1[%c0_7, %c0_8, %c0_9] : memref<1x32x32xf32, #tpu.memory_space<vmem>>, vector<1x32x32xf32>
    %25 = vector.shape_cast %24 : vector<1x32x32xf32> to vector<32x32xf32>
    %26 = vector.extract_strided_slice %25 {offsets = [0, 0], sizes = [30, 32], strides = [1, 1]} : vector<32x32xf32> to vector<30x32xf32>
    %27 = vector.extract_strided_slice %25 {offsets = [1, 0], sizes = [30, 32], strides = [1, 1]} : vector<32x32xf32> to vector<30x32xf32>
    %28 = vector.extract_strided_slice %25 {offsets = [2, 0], sizes = [30, 32], strides = [1, 1]} : vector<32x32xf32> to vector<30x32xf32>
    %29 = tpu.concatenate %26, %27, %28 in 1 : vector<30x32xf32>, vector<30x32xf32>, vector<30x32xf32> -> vector<30x96xf32>
    %c0_10 = arith.constant 0 : index
    %c0_11 = arith.constant 0 : index
    %30 = vector.load %arg2[%c0_10, %c0_11] : memref<96x32xf32, #tpu.memory_space<vmem>>, vector<96x32xf32>
    %cst_12 = arith.constant dense<0.000000e+00> : vector<30x32xf32>
    %31 = tpu.matmul %29, %30, %cst_12 {dimension_numbers = #tpu.dot_dimension_numbers<[1], [0], [0], [1], [0, 0, 1, 1], [], []>} : vector<30x96xf32>, vector<96x32xf32>, vector<30x32xf32> -> vector<30x32xf32>
    %c0_13 = arith.constant 0 : index
    %c0_14 = arith.constant 0 : index
    %32 = vector.load %arg3[%c0_13, %c0_14] : memref<1x32xf32, #tpu.memory_space<vmem>>, vector<1x32xf32>
    %33 = vector.shape_cast %32 : vector<1x32xf32> to vector<1x32xf32>
    %34 = vector.broadcast %33 : vector<1x32xf32> to vector<30x32xf32>
    %35 = arith.addf %31, %34 : vector<30x32xf32>
    %36 = tpu.iota {dimensions = array<i32: 0>} : vector<30x32xi32>
    %c1_i32_15 = arith.constant 1 : i32
    %37 = vector.broadcast %c1_i32_15 : i32 to vector<30x32xi32>
    %38 = arith.addi %36, %37 : vector<30x32xi32>
    %c16_i32_16 = arith.constant 16 : i32
    %c0_i32_17 = arith.constant 0 : i32
    %39 = arith.cmpi eq, %c16_i32_16, %c0_i32_17 : i32
    %c1_i32_18 = arith.constant 1 : i32
    %40 = arith.select %39, %c1_i32_18, %c16_i32_16 : i32
    %41 = vector.broadcast %40 : i32 to vector<30x32xi32>
    %42 = arith.remsi %38, %41 : vector<30x32xi32>
    %c0_i32_19 = arith.constant 0 : i32
    %43 = vector.broadcast %c0_i32_19 : i32 to vector<30x32xi32>
    %44 = arith.cmpi ne, %42, %43 : vector<30x32xi32>
    %c0_i32_20 = arith.constant 0 : i32
    %45 = vector.broadcast %c0_i32_20 : i32 to vector<30x32xi32>
    %46 = arith.cmpi slt, %42, %45 : vector<30x32xi32>
    %c0_i32_21 = arith.constant 0 : i32
    %47 = arith.cmpi slt, %40, %c0_i32_21 : i32
    %48 = vector.broadcast %47 : i1 to vector<30x32xi1>
    %49 = vector.broadcast %48 : vector<30x32xi1> to vector<30x32xi1>
    %50 = arith.xori %46, %49 : vector<30x32xi1>
    %51 = arith.andi %50, %44 : vector<30x32xi1>
    %52 = vector.broadcast %40 : i32 to vector<30x32xi32>
    %53 = arith.addi %42, %52 : vector<30x32xi32>
    %54 = arith.select %51, %53, %42 : vector<30x32xi1>, vector<30x32xi32>
    %c1_i32_22 = arith.constant 1 : i32
    %55 = vector.broadcast %c1_i32_22 : i32 to vector<30x32xi32>
    %56 = arith.cmpi sge, %54, %55 : vector<30x32xi32>
    %c14_i32 = arith.constant 14 : i32
    %57 = vector.broadcast %c14_i32 : i32 to vector<30x32xi32>
    %58 = arith.cmpi sle, %54, %57 : vector<30x32xi32>
    %59 = arith.andi %56, %58 : vector<30x32xi1>
    %cst_23 = arith.constant 0.000000e+00 : f32
    %60 = vector.broadcast %cst_23 : f32 to vector<30x32xf32>
    %61 = arith.select %59, %35, %60 : vector<30x32xi1>, vector<30x32xf32>
    %c1 = arith.constant 1 : index
    %c0_24 = arith.constant 0 : index
    %62 = vector.load %arg9[%c1, %c0_24] : memref<40x32xf32, #tpu.memory_space<vmem>>, vector<30x32xf32>
    tpu.vector_store %arg9[%c1, %c0_24], %61 {strides = array<i32>} : memref<40x32xf32, #tpu.memory_space<vmem>>, vector<30x32xf32>,
    %c0_25 = arith.constant 0 : index
    %c0_26 = arith.constant 0 : index
    %63 = vector.load %arg9[%c0_25, %c0_26] : memref<40x32xf32, #tpu.memory_space<vmem>>, vector<34x32xf32>
    %cst_27 = arith.constant 0.000000e+00 : f32
    %64 = vector.broadcast %cst_27 : f32 to vector<34x32xf32>
    %65 = arith.maximumf %63, %64 : vector<34x32xf32>
    %66 = vector.extract_strided_slice %65 {offsets = [0, 0], sizes = [32, 32], strides = [1, 1]} : vector<34x32xf32> to vector<32x32xf32>
    %67 = vector.extract_strided_slice %65 {offsets = [1, 0], sizes = [32, 32], strides = [1, 1]} : vector<34x32xf32> to vector<32x32xf32>
    %68 = vector.extract_strided_slice %65 {offsets = [2, 0], sizes = [32, 32], strides = [1, 1]} : vector<34x32xf32> to vector<32x32xf32>
    %69 = tpu.concatenate %66, %67, %68 in 1 : vector<32x32xf32>, vector<32x32xf32>, vector<32x32xf32> -> vector<32x96xf32>
    %c0_28 = arith.constant 0 : index
    %c0_29 = arith.constant 0 : index
    %70 = vector.load %arg4[%c0_28, %c0_29] : memref<96x32xf32, #tpu.memory_space<vmem>>, vector<96x32xf32>
    %cst_30 = arith.constant dense<0.000000e+00> : vector<32x32xf32>
    %71 = tpu.matmul %69, %70, %cst_30 {dimension_numbers = #tpu.dot_dimension_numbers<[1], [0], [0], [1], [0, 0, 1, 1], [], []>} : vector<32x96xf32>, vector<96x32xf32>, vector<32x32xf32> -> vector<32x32xf32>
    %72 = arith.addf %71, %2 : vector<32x32xf32>
    %c1_i32_31 = arith.constant 1 : i32
    %73 = vector.broadcast %c1_i32_31 : i32 to vector<32x32xi32>
    %74 = arith.cmpi sge, %21, %73 : vector<32x32xi32>
    %c14_i32_32 = arith.constant 14 : i32
    %75 = vector.broadcast %c14_i32_32 : i32 to vector<32x32xi32>
    %76 = arith.cmpi sle, %21, %75 : vector<32x32xi32>
    %77 = arith.andi %74, %76 : vector<32x32xi1>
    %cst_33 = arith.constant 0.000000e+00 : f32
    %78 = vector.broadcast %cst_33 : f32 to vector<32x32xf32>
    %79 = arith.select %77, %72, %78 : vector<32x32xi1>, vector<32x32xf32>
    %c1_34 = arith.constant 1 : index
    %c0_35 = arith.constant 0 : index
    %80 = vector.load %arg9[%c1_34, %c0_35] : memref<40x32xf32, #tpu.memory_space<vmem>>, vector<32x32xf32>
    tpu.vector_store %arg9[%c1_34, %c0_35], %79 {strides = array<i32>} : memref<40x32xf32, #tpu.memory_space<vmem>>, vector<32x32xf32>,
    %c0_36 = arith.constant 0 : index
    %c0_37 = arith.constant 0 : index
    %81 = vector.load %arg9[%c0_36, %c0_37] : memref<40x32xf32, #tpu.memory_space<vmem>>, vector<34x32xf32>
    %cst_38 = arith.constant 0.000000e+00 : f32
    %82 = vector.broadcast %cst_38 : f32 to vector<34x32xf32>
    %83 = arith.maximumf %81, %82 : vector<34x32xf32>
    %84 = vector.extract_strided_slice %83 {offsets = [0, 0], sizes = [32, 32], strides = [1, 1]} : vector<34x32xf32> to vector<32x32xf32>
    %85 = vector.extract_strided_slice %83 {offsets = [1, 0], sizes = [32, 32], strides = [1, 1]} : vector<34x32xf32> to vector<32x32xf32>
    %86 = vector.extract_strided_slice %83 {offsets = [2, 0], sizes = [32, 32], strides = [1, 1]} : vector<34x32xf32> to vector<32x32xf32>
    %87 = tpu.concatenate %84, %85, %86 in 1 : vector<32x32xf32>, vector<32x32xf32>, vector<32x32xf32> -> vector<32x96xf32>
    %c0_39 = arith.constant 0 : index
    %c0_40 = arith.constant 0 : index
    %88 = vector.load %arg4[%c0_39, %c0_40] : memref<96x32xf32, #tpu.memory_space<vmem>>, vector<96x32xf32>
    %cst_41 = arith.constant dense<0.000000e+00> : vector<32x32xf32>
    %89 = tpu.matmul %87, %88, %cst_41 {dimension_numbers = #tpu.dot_dimension_numbers<[1], [0], [0], [1], [0, 0, 1, 1], [], []>} : vector<32x96xf32>, vector<96x32xf32>, vector<32x32xf32> -> vector<32x32xf32>
    %90 = arith.addf %89, %2 : vector<32x32xf32>
    %c1_i32_42 = arith.constant 1 : i32
    %91 = vector.broadcast %c1_i32_42 : i32 to vector<32x32xi32>
    %92 = arith.cmpi sge, %21, %91 : vector<32x32xi32>
    %c14_i32_43 = arith.constant 14 : i32
    %93 = vector.broadcast %c14_i32_43 : i32 to vector<32x32xi32>
    %94 = arith.cmpi sle, %21, %93 : vector<32x32xi32>
    %95 = arith.andi %92, %94 : vector<32x32xi1>
    %cst_44 = arith.constant 0.000000e+00 : f32
    %96 = vector.broadcast %cst_44 : f32 to vector<32x32xf32>
    %97 = arith.select %95, %90, %96 : vector<32x32xi1>, vector<32x32xf32>
    %c1_45 = arith.constant 1 : index
    %c0_46 = arith.constant 0 : index
    %98 = vector.load %arg9[%c1_45, %c0_46] : memref<40x32xf32, #tpu.memory_space<vmem>>, vector<32x32xf32>
    tpu.vector_store %arg9[%c1_45, %c0_46], %97 {strides = array<i32>} : memref<40x32xf32, #tpu.memory_space<vmem>>, vector<32x32xf32>,
    %c1_47 = arith.constant 1 : index
    %c0_48 = arith.constant 0 : index
    %99 = tpu.strided_load %arg9[%c1_47, %c0_48] {strides = array<i32: 2, 1>} : memref<40x32xf32, #tpu.memory_space<vmem>>, vector<7x32xf32>
    %c2 = arith.constant 2 : index
    %c0_49 = arith.constant 0 : index
    %100 = tpu.strided_load %arg9[%c2, %c0_49] {strides = array<i32: 2, 1>} : memref<40x32xf32, #tpu.memory_space<vmem>>, vector<7x32xf32>
    %c3 = arith.constant 3 : index
    %c0_50 = arith.constant 0 : index
    %101 = tpu.strided_load %arg9[%c3, %c0_50] {strides = array<i32: 2, 1>} : memref<40x32xf32, #tpu.memory_space<vmem>>, vector<7x32xf32>
    %102 = arith.maximumf %99, %100 : vector<7x32xf32>
    %103 = arith.maximumf %102, %101 : vector<7x32xf32>
    %c17 = arith.constant 17 : index
    %c0_51 = arith.constant 0 : index
    %104 = tpu.strided_load %arg9[%c17, %c0_51] {strides = array<i32: 2, 1>} : memref<40x32xf32, #tpu.memory_space<vmem>>, vector<7x32xf32>
    %c18 = arith.constant 18 : index
    %c0_52 = arith.constant 0 : index
    %105 = tpu.strided_load %arg9[%c18, %c0_52] {strides = array<i32: 2, 1>} : memref<40x32xf32, #tpu.memory_space<vmem>>, vector<7x32xf32>
    %c19 = arith.constant 19 : index
    %c0_53 = arith.constant 0 : index
    %106 = tpu.strided_load %arg9[%c19, %c0_53] {strides = array<i32: 2, 1>} : memref<40x32xf32, #tpu.memory_space<vmem>>, vector<7x32xf32>
    %107 = arith.maximumf %104, %105 : vector<7x32xf32>
    %108 = arith.maximumf %107, %106 : vector<7x32xf32>
    %cst_54 = arith.constant 0.000000e+00 : f32
    %109 = vector.broadcast %cst_54 : f32 to vector<40x32xf32>
    %c0_55 = arith.constant 0 : index
    %c0_56 = arith.constant 0 : index
    %110 = vector.load %arg9[%c0_55, %c0_56] : memref<40x32xf32, #tpu.memory_space<vmem>>, vector<40x32xf32>
    tpu.vector_store %arg9[%c0_55, %c0_56], %109 {strides = array<i32>} : memref<40x32xf32, #tpu.memory_space<vmem>>, vector<40x32xf32>,
    %c1_57 = arith.constant 1 : index
    %c0_58 = arith.constant 0 : index
    %111 = vector.load %arg9[%c1_57, %c0_58] : memref<40x32xf32, #tpu.memory_space<vmem>>, vector<7x32xf32>
    tpu.vector_store %arg9[%c1_57, %c0_58], %103 {strides = array<i32>} : memref<40x32xf32, #tpu.memory_space<vmem>>, vector<7x32xf32>,
    %c17_59 = arith.constant 17 : index
    %c0_60 = arith.constant 0 : index
    %112 = vector.load %arg9[%c17_59, %c0_60] : memref<40x32xf32, #tpu.memory_space<vmem>>, vector<7x32xf32>
    tpu.vector_store %arg9[%c17_59, %c0_60], %108 {strides = array<i32>} : memref<40x32xf32, #tpu.memory_space<vmem>>, vector<7x32xf32>,
    %c0_61 = arith.constant 0 : index
    %c0_62 = arith.constant 0 : index
    %113 = vector.load %arg9[%c0_61, %c0_62] : memref<40x32xf32, #tpu.memory_space<vmem>>, vector<40x32xf32>
    %c0_63 = arith.constant 0 : index
    %c0_64 = arith.constant 0 : index
    %114 = vector.load %arg10[%c0_63, %c0_64] : memref<40x32xf32, #tpu.memory_space<vmem>>, vector<40x32xf32>
    tpu.vector_store %arg10[%c0_63, %c0_64], %113 {strides = array<i32>} : memref<40x32xf32, #tpu.memory_space<vmem>>, vector<40x32xf32>,
    %c0_65 = arith.constant 0 : index
    %c0_66 = arith.constant 0 : index
    %115 = vector.load %arg9[%c0_65, %c0_66] : memref<40x32xf32, #tpu.memory_space<vmem>>, vector<34x32xf32>
    %cst_67 = arith.constant 0.000000e+00 : f32
    %116 = vector.broadcast %cst_67 : f32 to vector<34x32xf32>
    %117 = arith.maximumf %115, %116 : vector<34x32xf32>
    %118 = vector.extract_strided_slice %117 {offsets = [0, 0], sizes = [32, 32], strides = [1, 1]} : vector<34x32xf32> to vector<32x32xf32>
    %119 = vector.extract_strided_slice %117 {offsets = [1, 0], sizes = [32, 32], strides = [1, 1]} : vector<34x32xf32> to vector<32x32xf32>
    %120 = vector.extract_strided_slice %117 {offsets = [2, 0], sizes = [32, 32], strides = [1, 1]} : vector<34x32xf32> to vector<32x32xf32>
    %121 = tpu.concatenate %118, %119, %120 in 1 : vector<32x32xf32>, vector<32x32xf32>, vector<32x32xf32> -> vector<32x96xf32>
    %c0_68 = arith.constant 0 : index
    %c0_69 = arith.constant 0 : index
    %122 = vector.load %arg4[%c0_68, %c0_69] : memref<96x32xf32, #tpu.memory_space<vmem>>, vector<96x32xf32>
    %cst_70 = arith.constant dense<0.000000e+00> : vector<32x32xf32>
    %123 = tpu.matmul %121, %122, %cst_70 {dimension_numbers = #tpu.dot_dimension_numbers<[1], [0], [0], [1], [0, 0, 1, 1], [], []>} : vector<32x96xf32>, vector<96x32xf32>, vector<32x32xf32> -> vector<32x32xf32>
    %124 = arith.addf %123, %2 : vector<32x32xf32>
    %c1_i32_71 = arith.constant 1 : i32
    %125 = vector.broadcast %c1_i32_71 : i32 to vector<32x32xi32>
    %126 = arith.cmpi sge, %21, %125 : vector<32x32xi32>
    %c7_i32 = arith.constant 7 : i32
    %127 = vector.broadcast %c7_i32 : i32 to vector<32x32xi32>
    %128 = arith.cmpi sle, %21, %127 : vector<32x32xi32>
    %129 = arith.andi %126, %128 : vector<32x32xi1>
    %cst_72 = arith.constant 0.000000e+00 : f32
    %130 = vector.broadcast %cst_72 : f32 to vector<32x32xf32>
    %131 = arith.select %129, %124, %130 : vector<32x32xi1>, vector<32x32xf32>
    %c1_73 = arith.constant 1 : index
    %c0_74 = arith.constant 0 : index
    %132 = vector.load %arg9[%c1_73, %c0_74] : memref<40x32xf32, #tpu.memory_space<vmem>>, vector<32x32xf32>
    tpu.vector_store %arg9[%c1_73, %c0_74], %131 {strides = array<i32>} : memref<40x32xf32, #tpu.memory_space<vmem>>, vector<32x32xf32>,
    %c0_75 = arith.constant 0 : index
    %c0_76 = arith.constant 0 : index
    %133 = vector.load %arg9[%c0_75, %c0_76] : memref<40x32xf32, #tpu.memory_space<vmem>>, vector<34x32xf32>
    %cst_77 = arith.constant 0.000000e+00 : f32
    %134 = vector.broadcast %cst_77 : f32 to vector<34x32xf32>
    %135 = arith.maximumf %133, %134 : vector<34x32xf32>
    %136 = vector.extract_strided_slice %135 {offsets = [0, 0], sizes = [32, 32], strides = [1, 1]} : vector<34x32xf32> to vector<32x32xf32>
    %137 = vector.extract_strided_slice %135 {offsets = [1, 0], sizes = [32, 32], strides = [1, 1]} : vector<34x32xf32> to vector<32x32xf32>
    %138 = vector.extract_strided_slice %135 {offsets = [2, 0], sizes = [32, 32], strides = [1, 1]} : vector<34x32xf32> to vector<32x32xf32>
    %139 = tpu.concatenate %136, %137, %138 in 1 : vector<32x32xf32>, vector<32x32xf32>, vector<32x32xf32> -> vector<32x96xf32>
    %c0_78 = arith.constant 0 : index
    %c0_79 = arith.constant 0 : index
    %140 = vector.load %arg4[%c0_78, %c0_79] : memref<96x32xf32, #tpu.memory_space<vmem>>, vector<96x32xf32>
    %cst_80 = arith.constant dense<0.000000e+00> : vector<32x32xf32>
    %141 = tpu.matmul %139, %140, %cst_80 {dimension_numbers = #tpu.dot_dimension_numbers<[1], [0], [0], [1], [0, 0, 1, 1], [], []>} : vector<32x96xf32>, vector<96x32xf32>, vector<32x32xf32> -> vector<32x32xf32>
    %142 = arith.addf %141, %2 : vector<32x32xf32>
    %c1_i32_81 = arith.constant 1 : i32
    %143 = vector.broadcast %c1_i32_81 : i32 to vector<32x32xi32>
    %144 = arith.cmpi sge, %21, %143 : vector<32x32xi32>
    %c7_i32_82 = arith.constant 7 : i32
    %145 = vector.broadcast %c7_i32_82 : i32 to vector<32x32xi32>
    %146 = arith.cmpi sle, %21, %145 : vector<32x32xi32>
    %147 = arith.andi %144, %146 : vector<32x32xi1>
    %cst_83 = arith.constant 0.000000e+00 : f32
    %148 = vector.broadcast %cst_83 : f32 to vector<32x32xf32>
    %149 = arith.select %147, %142, %148 : vector<32x32xi1>, vector<32x32xf32>
    %c1_84 = arith.constant 1 : index
    %c0_85 = arith.constant 0 : index
    %150 = vector.load %arg10[%c1_84, %c0_85] : memref<40x32xf32, #tpu.memory_space<vmem>>, vector<32x32xf32>
    %151 = arith.addf %149, %150 : vector<32x32xf32>
    %c1_86 = arith.constant 1 : index
    %c0_87 = arith.constant 0 : index
    %152 = vector.load %arg9[%c1_86, %c0_87] : memref<40x32xf32, #tpu.memory_space<vmem>>, vector<32x32xf32>
    tpu.vector_store %arg9[%c1_86, %c0_87], %151 {strides = array<i32>} : memref<40x32xf32, #tpu.memory_space<vmem>>, vector<32x32xf32>,
    %c1_88 = arith.constant 1 : index
    %c0_89 = arith.constant 0 : index
    %153 = tpu.strided_load %arg9[%c1_88, %c0_89] {strides = array<i32: 2, 1>} : memref<40x32xf32, #tpu.memory_space<vmem>>, vector<3x32xf32>
    %c2_90 = arith.constant 2 : index
    %c0_91 = arith.constant 0 : index
    %154 = tpu.strided_load %arg9[%c2_90, %c0_91] {strides = array<i32: 2, 1>} : memref<40x32xf32, #tpu.memory_space<vmem>>, vector<3x32xf32>
    %c3_92 = arith.constant 3 : index
    %c0_93 = arith.constant 0 : index
    %155 = tpu.strided_load %arg9[%c3_92, %c0_93] {strides = array<i32: 2, 1>} : memref<40x32xf32, #tpu.memory_space<vmem>>, vector<3x32xf32>
    %156 = arith.maximumf %153, %154 : vector<3x32xf32>
    %157 = arith.maximumf %156, %155 : vector<3x32xf32>
    %c17_94 = arith.constant 17 : index
    %c0_95 = arith.constant 0 : index
    %158 = tpu.strided_load %arg9[%c17_94, %c0_95] {strides = array<i32: 2, 1>} : memref<40x32xf32, #tpu.memory_space<vmem>>, vector<3x32xf32>
    %c18_96 = arith.constant 18 : index
    %c0_97 = arith.constant 0 : index
    %159 = tpu.strided_load %arg9[%c18_96, %c0_97] {strides = array<i32: 2, 1>} : memref<40x32xf32, #tpu.memory_space<vmem>>, vector<3x32xf32>
    %c19_98 = arith.constant 19 : index
    %c0_99 = arith.constant 0 : index
    %160 = tpu.strided_load %arg9[%c19_98, %c0_99] {strides = array<i32: 2, 1>} : memref<40x32xf32, #tpu.memory_space<vmem>>, vector<3x32xf32>
    %161 = arith.maximumf %158, %159 : vector<3x32xf32>
    %162 = arith.maximumf %161, %160 : vector<3x32xf32>
    %cst_100 = arith.constant 0.000000e+00 : f32
    %163 = vector.broadcast %cst_100 : f32 to vector<40x32xf32>
    %c0_101 = arith.constant 0 : index
    %c0_102 = arith.constant 0 : index
    %164 = vector.load %arg9[%c0_101, %c0_102] : memref<40x32xf32, #tpu.memory_space<vmem>>, vector<40x32xf32>
    tpu.vector_store %arg9[%c0_101, %c0_102], %163 {strides = array<i32>} : memref<40x32xf32, #tpu.memory_space<vmem>>, vector<40x32xf32>,
    %c1_103 = arith.constant 1 : index
    %c0_104 = arith.constant 0 : index
    %165 = vector.load %arg9[%c1_103, %c0_104] : memref<40x32xf32, #tpu.memory_space<vmem>>, vector<3x32xf32>
    tpu.vector_store %arg9[%c1_103, %c0_104], %157 {strides = array<i32>} : memref<40x32xf32, #tpu.memory_space<vmem>>, vector<3x32xf32>,
    %c17_105 = arith.constant 17 : index
    %c0_106 = arith.constant 0 : index
    %166 = vector.load %arg9[%c17_105, %c0_106] : memref<40x32xf32, #tpu.memory_space<vmem>>, vector<3x32xf32>
    tpu.vector_store %arg9[%c17_105, %c0_106], %162 {strides = array<i32>} : memref<40x32xf32, #tpu.memory_space<vmem>>, vector<3x32xf32>,
    %c0_107 = arith.constant 0 : index
    %c0_108 = arith.constant 0 : index
    %167 = vector.load %arg9[%c0_107, %c0_108] : memref<40x32xf32, #tpu.memory_space<vmem>>, vector<40x32xf32>
    %c0_109 = arith.constant 0 : index
    %c0_110 = arith.constant 0 : index
    %168 = vector.load %arg10[%c0_109, %c0_110] : memref<40x32xf32, #tpu.memory_space<vmem>>, vector<40x32xf32>
    tpu.vector_store %arg10[%c0_109, %c0_110], %167 {strides = array<i32>} : memref<40x32xf32, #tpu.memory_space<vmem>>, vector<40x32xf32>,
    %c0_111 = arith.constant 0 : index
    %c0_112 = arith.constant 0 : index
    %169 = vector.load %arg9[%c0_111, %c0_112] : memref<40x32xf32, #tpu.memory_space<vmem>>, vector<34x32xf32>
    %cst_113 = arith.constant 0.000000e+00 : f32
    %170 = vector.broadcast %cst_113 : f32 to vector<34x32xf32>
    %171 = arith.maximumf %169, %170 : vector<34x32xf32>
    %172 = vector.extract_strided_slice %171 {offsets = [0, 0], sizes = [32, 32], strides = [1, 1]} : vector<34x32xf32> to vector<32x32xf32>
    %173 = vector.extract_strided_slice %171 {offsets = [1, 0], sizes = [32, 32], strides = [1, 1]} : vector<34x32xf32> to vector<32x32xf32>
    %174 = vector.extract_strided_slice %171 {offsets = [2, 0], sizes = [32, 32], strides = [1, 1]} : vector<34x32xf32> to vector<32x32xf32>
    %175 = tpu.concatenate %172, %173, %174 in 1 : vector<32x32xf32>, vector<32x32xf32>, vector<32x32xf32> -> vector<32x96xf32>
    %c0_114 = arith.constant 0 : index
    %c0_115 = arith.constant 0 : index
    %176 = vector.load %arg4[%c0_114, %c0_115] : memref<96x32xf32, #tpu.memory_space<vmem>>, vector<96x32xf32>
    %cst_116 = arith.constant dense<0.000000e+00> : vector<32x32xf32>
    %177 = tpu.matmul %175, %176, %cst_116 {dimension_numbers = #tpu.dot_dimension_numbers<[1], [0], [0], [1], [0, 0, 1, 1], [], []>} : vector<32x96xf32>, vector<96x32xf32>, vector<32x32xf32> -> vector<32x32xf32>
    %178 = arith.addf %177, %2 : vector<32x32xf32>
    %c1_i32_117 = arith.constant 1 : i32
    %179 = vector.broadcast %c1_i32_117 : i32 to vector<32x32xi32>
    %180 = arith.cmpi sge, %21, %179 : vector<32x32xi32>
    %c3_i32 = arith.constant 3 : i32
    %181 = vector.broadcast %c3_i32 : i32 to vector<32x32xi32>
    %182 = arith.cmpi sle, %21, %181 : vector<32x32xi32>
    %183 = arith.andi %180, %182 : vector<32x32xi1>
    %cst_118 = arith.constant 0.000000e+00 : f32
    %184 = vector.broadcast %cst_118 : f32 to vector<32x32xf32>
    %185 = arith.select %183, %178, %184 : vector<32x32xi1>, vector<32x32xf32>
    %c1_119 = arith.constant 1 : index
    %c0_120 = arith.constant 0 : index
    %186 = vector.load %arg9[%c1_119, %c0_120] : memref<40x32xf32, #tpu.memory_space<vmem>>, vector<32x32xf32>
    tpu.vector_store %arg9[%c1_119, %c0_120], %185 {strides = array<i32>} : memref<40x32xf32, #tpu.memory_space<vmem>>, vector<32x32xf32>,
    %c0_121 = arith.constant 0 : index
    %c0_122 = arith.constant 0 : index
    %187 = vector.load %arg9[%c0_121, %c0_122] : memref<40x32xf32, #tpu.memory_space<vmem>>, vector<34x32xf32>
    %cst_123 = arith.constant 0.000000e+00 : f32
    %188 = vector.broadcast %cst_123 : f32 to vector<34x32xf32>
    %189 = arith.maximumf %187, %188 : vector<34x32xf32>
    %190 = vector.extract_strided_slice %189 {offsets = [0, 0], sizes = [32, 32], strides = [1, 1]} : vector<34x32xf32> to vector<32x32xf32>
    %191 = vector.extract_strided_slice %189 {offsets = [1, 0], sizes = [32, 32], strides = [1, 1]} : vector<34x32xf32> to vector<32x32xf32>
    %192 = vector.extract_strided_slice %189 {offsets = [2, 0], sizes = [32, 32], strides = [1, 1]} : vector<34x32xf32> to vector<32x32xf32>
    %193 = tpu.concatenate %190, %191, %192 in 1 : vector<32x32xf32>, vector<32x32xf32>, vector<32x32xf32> -> vector<32x96xf32>
    %c0_124 = arith.constant 0 : index
    %c0_125 = arith.constant 0 : index
    %194 = vector.load %arg4[%c0_124, %c0_125] : memref<96x32xf32, #tpu.memory_space<vmem>>, vector<96x32xf32>
    %cst_126 = arith.constant dense<0.000000e+00> : vector<32x32xf32>
    %195 = tpu.matmul %193, %194, %cst_126 {dimension_numbers = #tpu.dot_dimension_numbers<[1], [0], [0], [1], [0, 0, 1, 1], [], []>} : vector<32x96xf32>, vector<96x32xf32>, vector<32x32xf32> -> vector<32x32xf32>
    %196 = arith.addf %195, %2 : vector<32x32xf32>
    %c1_i32_127 = arith.constant 1 : i32
    %197 = vector.broadcast %c1_i32_127 : i32 to vector<32x32xi32>
    %198 = arith.cmpi sge, %21, %197 : vector<32x32xi32>
    %c3_i32_128 = arith.constant 3 : i32
    %199 = vector.broadcast %c3_i32_128 : i32 to vector<32x32xi32>
    %200 = arith.cmpi sle, %21, %199 : vector<32x32xi32>
    %201 = arith.andi %198, %200 : vector<32x32xi1>
    %cst_129 = arith.constant 0.000000e+00 : f32
    %202 = vector.broadcast %cst_129 : f32 to vector<32x32xf32>
    %203 = arith.select %201, %196, %202 : vector<32x32xi1>, vector<32x32xf32>
    %c1_130 = arith.constant 1 : index
    %c0_131 = arith.constant 0 : index
    %204 = vector.load %arg10[%c1_130, %c0_131] : memref<40x32xf32, #tpu.memory_space<vmem>>, vector<32x32xf32>
    %205 = arith.addf %203, %204 : vector<32x32xf32>
    %c1_132 = arith.constant 1 : index
    %c0_133 = arith.constant 0 : index
    %206 = vector.load %arg9[%c1_132, %c0_133] : memref<40x32xf32, #tpu.memory_space<vmem>>, vector<32x32xf32>
    tpu.vector_store %arg9[%c1_132, %c0_133], %205 {strides = array<i32>} : memref<40x32xf32, #tpu.memory_space<vmem>>, vector<32x32xf32>,
    %c1_134 = arith.constant 1 : index
    %c0_135 = arith.constant 0 : index
    %207 = tpu.strided_load %arg9[%c1_134, %c0_135] {strides = array<i32: 2, 1>} : memref<40x32xf32, #tpu.memory_space<vmem>>, vector<1x32xf32>
    %c2_136 = arith.constant 2 : index
    %c0_137 = arith.constant 0 : index
    %208 = tpu.strided_load %arg9[%c2_136, %c0_137] {strides = array<i32: 2, 1>} : memref<40x32xf32, #tpu.memory_space<vmem>>, vector<1x32xf32>
    %c3_138 = arith.constant 3 : index
    %c0_139 = arith.constant 0 : index
    %209 = tpu.strided_load %arg9[%c3_138, %c0_139] {strides = array<i32: 2, 1>} : memref<40x32xf32, #tpu.memory_space<vmem>>, vector<1x32xf32>
    %210 = arith.maximumf %207, %208 : vector<1x32xf32>
    %211 = arith.maximumf %210, %209 : vector<1x32xf32>
    %c17_140 = arith.constant 17 : index
    %c0_141 = arith.constant 0 : index
    %212 = tpu.strided_load %arg9[%c17_140, %c0_141] {strides = array<i32: 2, 1>} : memref<40x32xf32, #tpu.memory_space<vmem>>, vector<1x32xf32>
    %c18_142 = arith.constant 18 : index
    %c0_143 = arith.constant 0 : index
    %213 = tpu.strided_load %arg9[%c18_142, %c0_143] {strides = array<i32: 2, 1>} : memref<40x32xf32, #tpu.memory_space<vmem>>, vector<1x32xf32>
    %c19_144 = arith.constant 19 : index
    %c0_145 = arith.constant 0 : index
    %214 = tpu.strided_load %arg9[%c19_144, %c0_145] {strides = array<i32: 2, 1>} : memref<40x32xf32, #tpu.memory_space<vmem>>, vector<1x32xf32>
    %215 = arith.maximumf %212, %213 : vector<1x32xf32>
    %216 = arith.maximumf %215, %214 : vector<1x32xf32>
    %cst_146 = arith.constant 0.000000e+00 : f32
    %217 = vector.broadcast %cst_146 : f32 to vector<40x32xf32>
    %c0_147 = arith.constant 0 : index
    %c0_148 = arith.constant 0 : index
    %218 = vector.load %arg9[%c0_147, %c0_148] : memref<40x32xf32, #tpu.memory_space<vmem>>, vector<40x32xf32>
    tpu.vector_store %arg9[%c0_147, %c0_148], %217 {strides = array<i32>} : memref<40x32xf32, #tpu.memory_space<vmem>>, vector<40x32xf32>,
    %c1_149 = arith.constant 1 : index
    %c0_150 = arith.constant 0 : index
    %219 = vector.load %arg9[%c1_149, %c0_150] : memref<40x32xf32, #tpu.memory_space<vmem>>, vector<1x32xf32>
    tpu.vector_store %arg9[%c1_149, %c0_150], %211 {strides = array<i32>} : memref<40x32xf32, #tpu.memory_space<vmem>>, vector<1x32xf32>,
    %c17_151 = arith.constant 17 : index
    %c0_152 = arith.constant 0 : index
    %220 = vector.load %arg9[%c17_151, %c0_152] : memref<40x32xf32, #tpu.memory_space<vmem>>, vector<1x32xf32>
    tpu.vector_store %arg9[%c17_151, %c0_152], %216 {strides = array<i32>} : memref<40x32xf32, #tpu.memory_space<vmem>>, vector<1x32xf32>,
    %c0_153 = arith.constant 0 : index
    %c0_154 = arith.constant 0 : index
    %221 = vector.load %arg9[%c0_153, %c0_154] : memref<40x32xf32, #tpu.memory_space<vmem>>, vector<40x32xf32>
    %c0_155 = arith.constant 0 : index
    %c0_156 = arith.constant 0 : index
    %222 = vector.load %arg10[%c0_155, %c0_156] : memref<40x32xf32, #tpu.memory_space<vmem>>, vector<40x32xf32>
    tpu.vector_store %arg10[%c0_155, %c0_156], %221 {strides = array<i32>} : memref<40x32xf32, #tpu.memory_space<vmem>>, vector<40x32xf32>,
    %c0_157 = arith.constant 0 : index
    %c0_158 = arith.constant 0 : index
    %223 = vector.load %arg9[%c0_157, %c0_158] : memref<40x32xf32, #tpu.memory_space<vmem>>, vector<34x32xf32>
    %cst_159 = arith.constant 0.000000e+00 : f32
    %224 = vector.broadcast %cst_159 : f32 to vector<34x32xf32>
    %225 = arith.maximumf %223, %224 : vector<34x32xf32>
    %226 = vector.extract_strided_slice %225 {offsets = [0, 0], sizes = [32, 32], strides = [1, 1]} : vector<34x32xf32> to vector<32x32xf32>
    %227 = vector.extract_strided_slice %225 {offsets = [1, 0], sizes = [32, 32], strides = [1, 1]} : vector<34x32xf32> to vector<32x32xf32>
    %228 = vector.extract_strided_slice %225 {offsets = [2, 0], sizes = [32, 32], strides = [1, 1]} : vector<34x32xf32> to vector<32x32xf32>
    %229 = tpu.concatenate %226, %227, %228 in 1 : vector<32x32xf32>, vector<32x32xf32>, vector<32x32xf32> -> vector<32x96xf32>
    %c0_160 = arith.constant 0 : index
    %c0_161 = arith.constant 0 : index
    %230 = vector.load %arg4[%c0_160, %c0_161] : memref<96x32xf32, #tpu.memory_space<vmem>>, vector<96x32xf32>
    %cst_162 = arith.constant dense<0.000000e+00> : vector<32x32xf32>
    %231 = tpu.matmul %229, %230, %cst_162 {dimension_numbers = #tpu.dot_dimension_numbers<[1], [0], [0], [1], [0, 0, 1, 1], [], []>} : vector<32x96xf32>, vector<96x32xf32>, vector<32x32xf32> -> vector<32x32xf32>
    %232 = arith.addf %231, %2 : vector<32x32xf32>
    %c1_i32_163 = arith.constant 1 : i32
    %233 = vector.broadcast %c1_i32_163 : i32 to vector<32x32xi32>
    %234 = arith.cmpi sge, %21, %233 : vector<32x32xi32>
    %c1_i32_164 = arith.constant 1 : i32
    %235 = vector.broadcast %c1_i32_164 : i32 to vector<32x32xi32>
    %236 = arith.cmpi sle, %21, %235 : vector<32x32xi32>
    %237 = arith.andi %234, %236 : vector<32x32xi1>
    %cst_165 = arith.constant 0.000000e+00 : f32
    %238 = vector.broadcast %cst_165 : f32 to vector<32x32xf32>
    %239 = arith.select %237, %232, %238 : vector<32x32xi1>, vector<32x32xf32>
    %c1_166 = arith.constant 1 : index
    %c0_167 = arith.constant 0 : index
    %240 = vector.load %arg9[%c1_166, %c0_167] : memref<40x32xf32, #tpu.memory_space<vmem>>, vector<32x32xf32>
    tpu.vector_store %arg9[%c1_166, %c0_167], %239 {strides = array<i32>} : memref<40x32xf32, #tpu.memory_space<vmem>>, vector<32x32xf32>,
    %c0_168 = arith.constant 0 : index
    %c0_169 = arith.constant 0 : index
    %241 = vector.load %arg9[%c0_168, %c0_169] : memref<40x32xf32, #tpu.memory_space<vmem>>, vector<34x32xf32>
    %cst_170 = arith.constant 0.000000e+00 : f32
    %242 = vector.broadcast %cst_170 : f32 to vector<34x32xf32>
    %243 = arith.maximumf %241, %242 : vector<34x32xf32>
    %244 = vector.extract_strided_slice %243 {offsets = [0, 0], sizes = [32, 32], strides = [1, 1]} : vector<34x32xf32> to vector<32x32xf32>
    %245 = vector.extract_strided_slice %243 {offsets = [1, 0], sizes = [32, 32], strides = [1, 1]} : vector<34x32xf32> to vector<32x32xf32>
    %246 = vector.extract_strided_slice %243 {offsets = [2, 0], sizes = [32, 32], strides = [1, 1]} : vector<34x32xf32> to vector<32x32xf32>
    %247 = tpu.concatenate %244, %245, %246 in 1 : vector<32x32xf32>, vector<32x32xf32>, vector<32x32xf32> -> vector<32x96xf32>
    %c0_171 = arith.constant 0 : index
    %c0_172 = arith.constant 0 : index
    %248 = vector.load %arg4[%c0_171, %c0_172] : memref<96x32xf32, #tpu.memory_space<vmem>>, vector<96x32xf32>
    %cst_173 = arith.constant dense<0.000000e+00> : vector<32x32xf32>
    %249 = tpu.matmul %247, %248, %cst_173 {dimension_numbers = #tpu.dot_dimension_numbers<[1], [0], [0], [1], [0, 0, 1, 1], [], []>} : vector<32x96xf32>, vector<96x32xf32>, vector<32x32xf32> -> vector<32x32xf32>
    %250 = arith.addf %249, %2 : vector<32x32xf32>
    %c1_i32_174 = arith.constant 1 : i32
    %251 = vector.broadcast %c1_i32_174 : i32 to vector<32x32xi32>
    %252 = arith.cmpi sge, %21, %251 : vector<32x32xi32>
    %c1_i32_175 = arith.constant 1 : i32
    %253 = vector.broadcast %c1_i32_175 : i32 to vector<32x32xi32>
    %254 = arith.cmpi sle, %21, %253 : vector<32x32xi32>
    %255 = arith.andi %252, %254 : vector<32x32xi1>
    %cst_176 = arith.constant 0.000000e+00 : f32
    %256 = vector.broadcast %cst_176 : f32 to vector<32x32xf32>
    %257 = arith.select %255, %250, %256 : vector<32x32xi1>, vector<32x32xf32>
    %c1_177 = arith.constant 1 : index
    %c0_178 = arith.constant 0 : index
    %258 = vector.load %arg10[%c1_177, %c0_178] : memref<40x32xf32, #tpu.memory_space<vmem>>, vector<32x32xf32>
    %259 = arith.addf %257, %258 : vector<32x32xf32>
    %c1_179 = arith.constant 1 : index
    %c0_180 = arith.constant 0 : index
    %260 = vector.load %arg9[%c1_179, %c0_180] : memref<40x32xf32, #tpu.memory_space<vmem>>, vector<32x32xf32>
    tpu.vector_store %arg9[%c1_179, %c0_180], %259 {strides = array<i32>} : memref<40x32xf32, #tpu.memory_space<vmem>>, vector<32x32xf32>,
    %c1_181 = arith.constant 1 : index
    %c0_182 = arith.constant 0 : index
    %261 = tpu.strided_load %arg9[%c1_181, %c0_182] {strides = array<i32: 16, 1>} : memref<40x32xf32, #tpu.memory_space<vmem>>, vector<2x32xf32>
    %c0_183 = arith.constant 0 : index
    %c0_184 = arith.constant 0 : index
    %262 = vector.load %arg6[%c0_183, %c0_184] : memref<32x128xf32, #tpu.memory_space<vmem>>, vector<32x128xf32>
    %cst_185 = arith.constant dense<0.000000e+00> : vector<2x128xf32>
    %263 = tpu.matmul %261, %262, %cst_185 {dimension_numbers = #tpu.dot_dimension_numbers<[1], [0], [0], [1], [0, 0, 1, 1], [], []>} : vector<2x32xf32>, vector<32x128xf32>, vector<2x128xf32> -> vector<2x128xf32>
    %c0_186 = arith.constant 0 : index
    %c0_187 = arith.constant 0 : index
    %264 = vector.load %arg7[%c0_186, %c0_187] : memref<1x128xf32, #tpu.memory_space<vmem>>, vector<1x128xf32>
    %265 = vector.shape_cast %264 : vector<1x128xf32> to vector<1x128xf32>
    %266 = vector.broadcast %265 : vector<1x128xf32> to vector<2x128xf32>
    %267 = arith.addf %263, %266 : vector<2x128xf32>
    %c0_188 = arith.constant 0 : index
    %c0_189 = arith.constant 0 : index
    %c0_190 = arith.constant 0 : index
    %268 = vector.load %arg8[%c0_188, %c0_189, %c0_190] : memref<1x2x128xf32, #tpu.memory_space<vmem>>, vector<1x2x128xf32>
    %269 = vector.shape_cast %268 : vector<1x2x128xf32> to vector<2x128xf32>
    %270 = vector.shape_cast %267 : vector<2x128xf32> to vector<1x2x128xf32>
    tpu.vector_store %arg8[%c0_188, %c0_189, %c0_190], %270 {strides = array<i32>} : memref<1x2x128xf32, #tpu.memory_space<vmem>>, vector<1x2x128xf32>,
    return
  }
  func.func @transform_0(%arg0: i32) -> (i32, i32, i32) {
    %c0_i32 = arith.constant 0 : i32
    %c0_i32_0 = arith.constant 0 : i32
    %c0_i32_1 = arith.constant 0 : i32
    return %arg0, %c0_i32, %c0_i32_0 : i32, i32, i32
  }
  func.func @transform_1(%arg0: i32) -> (i32, i32) {
    %c0_i32 = arith.constant 0 : i32
    %c0_i32_0 = arith.constant 0 : i32
    %c0_i32_1 = arith.constant 0 : i32
    return %c0_i32, %c0_i32_0 : i32, i32
  }
  func.func @transform_2(%arg0: i32) -> (i32, i32) {
    %c0_i32 = arith.constant 0 : i32
    %c0_i32_0 = arith.constant 0 : i32
    %c0_i32_1 = arith.constant 0 : i32
    return %c0_i32, %c0_i32_0 : i32, i32
  }
  func.func @transform_3(%arg0: i32) -> (i32, i32) {
    %c0_i32 = arith.constant 0 : i32
    %c0_i32_0 = arith.constant 0 : i32
    %c0_i32_1 = arith.constant 0 : i32
    return %c0_i32, %c0_i32_0 : i32, i32
  }
  func.func @transform_4(%arg0: i32) -> (i32, i32) {
    %c0_i32 = arith.constant 0 : i32
    %c0_i32_0 = arith.constant 0 : i32
    %c0_i32_1 = arith.constant 0 : i32
    return %c0_i32, %c0_i32_0 : i32, i32
  }
  func.func @transform_5(%arg0: i32) -> (i32, i32) {
    %c0_i32 = arith.constant 0 : i32
    %c0_i32_0 = arith.constant 0 : i32
    %c0_i32_1 = arith.constant 0 : i32
    return %c0_i32, %c0_i32_0 : i32, i32
  }
  func.func @transform_6(%arg0: i32) -> (i32, i32) {
    %c0_i32 = arith.constant 0 : i32
    %c0_i32_0 = arith.constant 0 : i32
    %c0_i32_1 = arith.constant 0 : i32
    return %c0_i32, %c0_i32_0 : i32, i32
  }
  func.func @transform_7(%arg0: i32) -> (i32, i32, i32) {
    %c0_i32 = arith.constant 0 : i32
    %c0_i32_0 = arith.constant 0 : i32
    %c0_i32_1 = arith.constant 0 : i32
    return %arg0, %c0_i32, %c0_i32_0 : i32, i32, i32
  }
}

</mosaic_0001>

<llo_original>
// kernel: tpu_custom_call.1
$region0: #{tpu_custom_call.1}
  #allocation0 [shape = 'u32[]', space=smem, size = 0x4, offset = 0x4, fixed_abs, tag = 'smem constant byte address 0x4 - core index']
  #allocation1 [shape = 'u32[144,128]{1,0:T(1,128)}', space=vmem, size = 0x12000, scoped, tag = 'internal scratch']
  #allocation2 [shape = 'f32[40,32]{1,0:T(8,128)}', space=vmem, size = 0x5000, scoped, tag = 'scratch operand']
  #allocation3 [shape = 'f32[40,32]{1,0:T(8,128)}', space=vmem, size = 0x5000, scoped, tag = 'scratch operand']
  %s0 = inlined_call_operand.vmem [shape: f32[2,32,32], index: 0, kind: input, shape index: {}]
  %s1 = inlined_call_operand.vmem [shape: f32[96,32], index: 1, kind: input, shape index: {}]
  %s2 = inlined_call_operand.vmem [shape: f32[1,32], index: 2, kind: input, shape index: {}]
  %s3 = inlined_call_operand.vmem [shape: f32[96,32], index: 3, kind: input, shape index: {}]
  %s4 = inlined_call_operand.vmem [shape: f32[1,32], index: 4, kind: input, shape index: {}]
  %s5 = inlined_call_operand.vmem [shape: f32[32,128], index: 5, kind: input, shape index: {}]
  %s6 = inlined_call_operand.vmem [shape: f32[1,128], index: 6, kind: input, shape index: {}]
  %s7 = inlined_call_operand.hbm [shape: f32[2,2,128], index: 7, kind: output, shape index: {}]
  %s8 = sld [smem:[#allocation0]]
  $region61: #{tpu_custom_call.1} parent=0
    _
  %s10 = ssub.s32 1, %s8
  %s11 = scalar_select 0, %s10, %s8
  $region1: #{tpu_custom_call.1} parent=0
    #allocation4 [shape = 'u8[2048]{0}', space=vmem, size = 0x800, scoped, tag = 'output window, operand 0']
    #allocation5 [shape = 's32[2]{0}', space=sflag, size = 0x8, scoped, tag = 'scoped memory for tpu_custom_call.1']
    %12 = vsyncpa [#allocation5], 0
    %s13 = scalar_lea.sflag [#allocation5], 1
    %14 = vsyncpa %s13, 0
    loop: start=0, step=1, limit=4
    $region2: #{tpu_custom_call.1} parent=1 // loop_pre_header
      _
    $region3: #{tpu_custom_call.1} parent=1 // loop_header
      %s16 = sphi 0, %s20
      %p17 = scmp.ge.s32.totalorder %s16, 4
      %s26 = sphi 0, %s28
      %s29 = sphi 0, %s26
      %s30 = sphi 0, %s29
      %s46 = sphi 0, %s30
      %s50 = sphi 0, %s50
      %s52 = sphi 0, %s50
      %s53 = sphi 0, %s52
      %s67 = sphi 0, %s53
      %s71 = sphi 0, %s71
      %s73 = sphi 0, %s71
      %s74 = sphi 0, %s73
      %s88 = sphi 0, %s74
      %s92 = sphi 0, %s92
      %s94 = sphi 0, %s92
      %s95 = sphi 0, %s94
      %s109 = sphi 0, %s95
      %s113 = sphi 0, %s113
      %s115 = sphi 0, %s113
      %s116 = sphi 0, %s115
      %s130 = sphi 0, %s116
      %s134 = sphi 0, %s134
      %s136 = sphi 0, %s134
      %s137 = sphi 0, %s136
      %s151 = sphi 0, %s137
      %s155 = sphi 0, %s155
      %s157 = sphi 0, %s155
      %s158 = sphi 0, %s157
      %s172 = sphi 0, %s158
      %s178 = sphi 0, %s180
      %s181 = sphi 0, %s178
      %s182 = sphi 0, %s181
      %s198 = sphi 0, %s182
    $region4: #{tpu_custom_call.1} parent=1 // loop_header_branch
      %19 = sbr.rel (%p17) target = $region8
    $region5: #{tpu_custom_call.1} parent=1 // loop_body
      %s21 = ssub.s32 %s16, 1
      %s22 = ssub.s32 %s16, 2
      %s23 = sadd.s32 %s16, 1
      %s24 = ssub.s32 %s16, %s23
      %p25 = scmp.eq.s32.totalorder %s24, 0
      %s27 = sadd.s32 %s26, 1
      %s28 = scalar_select %p25, %s26, %s27
      %p31 = pneg %p25
      %p32 = scmp.eq.s32.totalorder %s16, 1
      %p33 = por %p31, %p32
      %p34 = scmp.ne.s32.totalorder %s26, %s29
      %p35 = scmp.eq.s32.totalorder %s16, 0
      %p36 = por %p34, %p35
      %p37 = scmp.ne.s32.totalorder %s26, %s29
      %p38 = scmp.eq.s32.totalorder %s21, 1
      %p39 = por %p37, %p38
      %p40 = scmp.ne.s32.totalorder %s29, %s30
      %p41 = scmp.eq.s32.totalorder %s21, 0
      %p42 = por %p40, %p41
      %p43 = scmp.ne.s32.totalorder %s29, %s30
      %p44 = scmp.eq.s32.totalorder %s22, 1
      %p45 = por %p43, %p44
      %p47 = scmp.ne.s32.totalorder %s30, %s46
      %p48 = scmp.eq.s32.totalorder %s22, 0
      %p49 = por %p47, %p48
      %s51 = sadd.s32 %s50, 1
      %p54 = scmp.eq.s32.totalorder %s16, 1
      %p55 = scmp.ne.s32.totalorder %s50, %s52
      %p56 = scmp.eq.s32.totalorder %s16, 0
      %p57 = por %p55, %p56
      %p58 = scmp.ne.s32.totalorder %s50, %s52
      %p59 = scmp.eq.s32.totalorder %s21, 1
      %p60 = por %p58, %p59
      %p61 = scmp.ne.s32.totalorder %s52, %s53
      %p62 = scmp.eq.s32.totalorder %s21, 0
      %p63 = por %p61, %p62
      %p64 = scmp.ne.s32.totalorder %s52, %s53
      %p65 = scmp.eq.s32.totalorder %s22, 1
      %p66 = por %p64, %p65
      %p68 = scmp.ne.s32.totalorder %s53, %s67
      %p69 = scmp.eq.s32.totalorder %s22, 0
      %p70 = por %p68, %p69
      %s72 = sadd.s32 %s71, 1
      %p75 = scmp.eq.s32.totalorder %s16, 1
      %p76 = scmp.ne.s32.totalorder %s71, %s73
      %p77 = scmp.eq.s32.totalorder %s16, 0
      %p78 = por %p76, %p77
      %p79 = scmp.ne.s32.totalorder %s71, %s73
      %p80 = scmp.eq.s32.totalorder %s21, 1
      %p81 = por %p79, %p80
      %p82 = scmp.ne.s32.totalorder %s73, %s74
      %p83 = scmp.eq.s32.totalorder %s21, 0
      %p84 = por %p82, %p83
      %p85 = scmp.ne.s32.totalorder %s73, %s74
      %p86 = scmp.eq.s32.totalorder %s22, 1
      %p87 = por %p85, %p86
      %p89 = scmp.ne.s32.totalorder %s74, %s88
      %p90 = scmp.eq.s32.totalorder %s22, 0
      %p91 = por %p89, %p90
      %s93 = sadd.s32 %s92, 1
      %p96 = scmp.eq.s32.totalorder %s16, 1
      %p97 = scmp.ne.s32.totalorder %s92, %s94
      %p98 = scmp.eq.s32.totalorder %s16, 0
      %p99 = por %p97, %p98
      %p100 = scmp.ne.s32.totalorder %s92, %s94
      %p101 = scmp.eq.s32.totalorder %s21, 1
      %p102 = por %p100, %p101
      %p103 = scmp.ne.s32.totalorder %s94, %s95
      %p104 = scmp.eq.s32.totalorder %s21, 0
      %p105 = por %p103, %p104
      %p106 = scmp.ne.s32.totalorder %s94, %s95
      %p107 = scmp.eq.s32.totalorder %s22, 1
      %p108 = por %p106, %p107
      %p110 = scmp.ne.s32.totalorder %s95, %s109
      %p111 = scmp.eq.s32.totalorder %s22, 0
      %p112 = por %p110, %p111
      %s114 = sadd.s32 %s113, 1
      %p117 = scmp.eq.s32.totalorder %s16, 1
      %p118 = scmp.ne.s32.totalorder %s113, %s115
      %p119 = scmp.eq.s32.totalorder %s16, 0
      %p120 = por %p118, %p119
      %p121 = scmp.ne.s32.totalorder %s113, %s115
      %p122 = scmp.eq.s32.totalorder %s21, 1
      %p123 = por %p121, %p122
      %p124 = scmp.ne.s32.totalorder %s115, %s116
      %p125 = scmp.eq.s32.totalorder %s21, 0
      %p126 = por %p124, %p125
      %p127 = scmp.ne.s32.totalorder %s115, %s116
      %p128 = scmp.eq.s32.totalorder %s22, 1
      %p129 = por %p127, %p128
      %p131 = scmp.ne.s32.totalorder %s116, %s130
      %p132 = scmp.eq.s32.totalorder %s22, 0
      %p133 = por %p131, %p132
      %s135 = sadd.s32 %s134, 1
      %p138 = scmp.eq.s32.totalorder %s16, 1
      %p139 = scmp.ne.s32.totalorder %s134, %s136
      %p140 = scmp.eq.s32.totalorder %s16, 0
      %p141 = por %p139, %p140
      %p142 = scmp.ne.s32.totalorder %s134, %s136
      %p143 = scmp.eq.s32.totalorder %s21, 1
      %p144 = por %p142, %p143
      %p145 = scmp.ne.s32.totalorder %s136, %s137
      %p146 = scmp.eq.s32.totalorder %s21, 0
      %p147 = por %p145, %p146
      %p148 = scmp.ne.s32.totalorder %s136, %s137
      %p149 = scmp.eq.s32.totalorder %s22, 1
      %p150 = por %p148, %p149
      %p152 = scmp.ne.s32.totalorder %s137, %s151
      %p153 = scmp.eq.s32.totalorder %s22, 0
      %p154 = por %p152, %p153
      %s156 = sadd.s32 %s155, 1
      %p159 = scmp.eq.s32.totalorder %s16, 1
      %p160 = scmp.ne.s32.totalorder %s155, %s157
      %p161 = scmp.eq.s32.totalorder %s16, 0
      %p162 = por %p160, %p161
      %p163 = scmp.ne.s32.totalorder %s155, %s157
      %p164 = scmp.eq.s32.totalorder %s21, 1
      %p165 = por %p163, %p164
      %p166 = scmp.ne.s32.totalorder %s157, %s158
      %p167 = scmp.eq.s32.totalorder %s21, 0
      %p168 = por %p166, %p167
      %p169 = scmp.ne.s32.totalorder %s157, %s158
      %p170 = scmp.eq.s32.totalorder %s22, 1
      %p171 = por %p169, %p170
      %p173 = scmp.ne.s32.totalorder %s158, %s172
      %p174 = scmp.eq.s32.totalorder %s22, 0
      %p175 = por %p173, %p174
      %s176 = ssub.s32 %s16, %s23
      %p177 = scmp.eq.s32.totalorder %s176, 0
      %s179 = sadd.s32 %s178, 1
      %s180 = scalar_select %p177, %s178, %s179
      %p183 = pneg %p177
      %p184 = scmp.eq.s32.totalorder %s16, 1
      %p185 = por %p183, %p184
      %p186 = scmp.ne.s32.totalorder %s178, %s181
      %p187 = scmp.eq.s32.totalorder %s16, 0
      %p188 = por %p186, %p187
      %p189 = scmp.ne.s32.totalorder %s178, %s181
      %p190 = scmp.eq.s32.totalorder %s21, 1
      %p191 = por %p189, %p190
      %p192 = scmp.ne.s32.totalorder %s181, %s182
      %p193 = scmp.eq.s32.totalorder %s21, 0
      %p194 = por %p192, %p193
      %p195 = scmp.ne.s32.totalorder %s181, %s182
      %p196 = scmp.eq.s32.totalorder %s22, 1
      %p197 = por %p195, %p196
      %p199 = scmp.ne.s32.totalorder %s182, %s198
      %p200 = scmp.eq.s32.totalorder %s22, 0
      %p201 = por %p199, %p200
      %p202 = scmp.le.s32.totalorder 1, %s16
      %p203 = scmp.lt.s32.totalorder %s16, 3
      %p204 = pnand %p202, %p203
      %p205 = pneg %p204
      // Predicated region
      $region9: #{tpu_custom_call.1} parent=5 // pred_check
        _
      $region10: #{tpu_custom_call.1} parent=5 // pred_check_branch
        %207 = sbr.rel (%p204) target = $region12
      $region11: #{tpu_custom_call.1} parent=5 // pred_region
        %s208 = ssub.s32 %s16, 1
        // Predicated region
        $region13: #{tpu_custom_call.1} parent=11 // pred_check
          %p209 = pneg %p63
        $region14: #{tpu_custom_call.1} parent=11 // pred_check_branch
          %211 = sbr.rel (%p209) target = $region16
        $region15: #{tpu_custom_call.1} parent=11 // pred_region
          _
        $region16: #{tpu_custom_call.1} parent=11 // pred_fallthru
          _
        // Predicated region
        $region17: #{tpu_custom_call.1} parent=11 // pred_check
          %p212 = pneg %p84
        $region18: #{tpu_custom_call.1} parent=11 // pred_check_branch
          %214 = sbr.rel (%p212) target = $region20
        $region19: #{tpu_custom_call.1} parent=11 // pred_region
          _
        $region20: #{tpu_custom_call.1} parent=11 // pred_fallthru
          _
        // Predicated region
        $region21: #{tpu_custom_call.1} parent=11 // pred_check
          %p215 = pneg %p105
        $region22: #{tpu_custom_call.1} parent=11 // pred_check_branch
          %217 = sbr.rel (%p215) target = $region24
        $region23: #{tpu_custom_call.1} parent=11 // pred_region
          _
        $region24: #{tpu_custom_call.1} parent=11 // pred_fallthru
          _
        // Predicated region
        $region25: #{tpu_custom_call.1} parent=11 // pred_check
          %p218 = pneg %p126
        $region26: #{tpu_custom_call.1} parent=11 // pred_check_branch
          %220 = sbr.rel (%p218) target = $region28
        $region27: #{tpu_custom_call.1} parent=11 // pred_region
          _
        $region28: #{tpu_custom_call.1} parent=11 // pred_fallthru
          _
        // Predicated region
        $region29: #{tpu_custom_call.1} parent=11 // pred_check
          %p221 = pneg %p147
        $region30: #{tpu_custom_call.1} parent=11 // pred_check_branch
          %223 = sbr.rel (%p221) target = $region32
        $region31: #{tpu_custom_call.1} parent=11 // pred_region
          _
        $region32: #{tpu_custom_call.1} parent=11 // pred_fallthru
          _
        // Predicated region
        $region33: #{tpu_custom_call.1} parent=11 // pred_check
          %p224 = pneg %p168
        $region34: #{tpu_custom_call.1} parent=11 // pred_check_branch
          %226 = sbr.rel (%p224) target = $region36
        $region35: #{tpu_custom_call.1} parent=11 // pred_region
          _
        $region36: #{tpu_custom_call.1} parent=11 // pred_fallthru
          _
      $region12: #{tpu_custom_call.1} parent=5 // pred_fallthru
        _
      %p227 = scmp.lt.s32.totalorder %s16, 2
      // Predicated region
      $region37: #{tpu_custom_call.1} parent=5 // pred_check
        %p228 = pneg %p227
      $region38: #{tpu_custom_call.1} parent=5 // pred_check_branch
        %230 = sbr.rel (%p228) target = $region40
      $region39: #{tpu_custom_call.1} parent=5 // pred_region
        // Predicated region
        $region41: #{tpu_custom_call.1} parent=39 // pred_check
          %p231 = pneg %p36
        $region42: #{tpu_custom_call.1} parent=39 // pred_check_branch
          %233 = sbr.rel (%p231) target = $region44
        $region43: #{tpu_custom_call.1} parent=39 // pred_region
          %p234 = scmp.lt.s32.totalorder %s16, 1
          %s235 = scalar_select %p234, %s16, 1
          %s236 = smul.addr %s235, 4
          %s237 = smul.addr %s236, 8
          %s238 = scalar_lea.vmem %s0, %s237
        $region44: #{tpu_custom_call.1} parent=39 // pred_fallthru
          _
      $region40: #{tpu_custom_call.1} parent=5 // pred_fallthru
        _
      %p239 = scmp.le.s32.totalorder 1, %s16
      %p240 = scmp.lt.s32.totalorder %s16, 3
      %p241 = pnand %p239, %p240
      %p242 = pneg %p241
      // Predicated region
      $region45: #{tpu_custom_call.1} parent=5 // pred_check
        _
      $region46: #{tpu_custom_call.1} parent=5 // pred_check_branch
        %244 = sbr.rel (%p241) target = $region48
      $region47: #{tpu_custom_call.1} parent=5 // pred_region
        %s245 = ssub.s32 %s16, 1
        %p246 = scmp.lt.s32.totalorder %s21, 1
        %s247 = scalar_select %p246, %s21, 1
        %s248 = smul.addr %s247, 4
        %s249 = smul.addr %s248, 8
        %s250 = scalar_lea.vmem %s0, %s249
        %p251 = pneg %p42
        %p252 = pneg %p39
        %p253 = pneg %p63
        %p254 = pneg %p60
        %p255 = pneg %p84
        %p256 = pneg %p81
        %p257 = pneg %p105
        %p258 = pneg %p102
        %p259 = pneg %p126
        %p260 = pneg %p123
        %p261 = pneg %p147
        %p262 = pneg %p144
        %p263 = pneg %p168
        %p264 = pneg %p165
        %p265 = pneg %p194
        %p266 = pneg %p191
        %s267 = sand.u32 %s181, 1
        %s268 = scalar_lea.sflag [#allocation5], %s267
        %s269 = sand.u32 %s181, 1
        %s270 = smul.addr %s269, 2
        %s271 = scalar_lea.vmem [#allocation4], %s270
        %p272 = scmp.lt.s32.totalorder %s21, 1
        %s273 = scalar_select %p272, %s21, 1
        %s274 = smul.addr %s273, 4
        %s275 = smul.addr %s274, 8
        %s276 = scalar_lea.vmem %s0, %s275
        %v277 = vld [vmem:[%s4] sm:$0x1]
        %v279 = vlaneseq
        %v280 = vshrl.u32 %v279, 7
        %v281 = vsub.s32 0, %v280
        %v282 = vrot.slane %v277, %v281
        %v284 = vlaneseq
        %v285 = vshrl.u32 %v284, 7
        %v286 = vadd.s32 %v285, 8
        %v287 = vadd.s32 %v285, 16
        %v288 = vadd.s32 %v285, 24
        %v289 = vadd.s32 %v285, 1
        %v290 = vadd.s32 %v286, 1
        %v291 = vadd.s32 %v287, 1
        %v292 = vadd.s32 %v288, 1
        %vm293 = vcmp.lt.s32.totalorder %v289, 0
        %v294 = vsub.s32 0, %v289
        %v295 = vsel %vm293, %v294, %v289
        %v296 = vshrl.u32 %v295, 4
        %v297 = vand.u32 %v295, 15
        %v298 = vsub.s32 0, %v297
        %v299 = vsel %vm293, %v298, %v297
        %vm300 = vcmp.lt.s32.totalorder %v290, 0
        %v301 = vsub.s32 0, %v290
        %v302 = vsel %vm300, %v301, %v290
        %v303 = vshrl.u32 %v302, 4
        %v304 = vand.u32 %v302, 15
        %v305 = vsub.s32 0, %v304
        %v306 = vsel %vm300, %v305, %v304
        %vm307 = vcmp.lt.s32.totalorder %v291, 0
        %v308 = vsub.s32 0, %v291
        %v309 = vsel %vm307, %v308, %v291
        %v310 = vshrl.u32 %v309, 4
        %v311 = vand.u32 %v309, 15
        %v312 = vsub.s32 0, %v311
        %v313 = vsel %vm307, %v312, %v311
        %vm314 = vcmp.lt.s32.totalorder %v292, 0
        %v315 = vsub.s32 0, %v292
        %v316 = vsel %vm314, %v315, %v292
        %v317 = vshrl.u32 %v316, 4
        %v318 = vand.u32 %v316, 15
        %v319 = vsub.s32 0, %v318
        %v320 = vsel %vm314, %v319, %v318
        %vm321 = vcmp.ne.s32.totalorder %v299, 0
        %vm322 = vcmp.ne.s32.totalorder %v306, 0
        %vm323 = vcmp.ne.s32.totalorder %v313, 0
        %vm324 = vcmp.ne.s32.totalorder %v320, 0
        %vm325 = vcmp.lt.s32.totalorder %v299, 0
        %vm326 = vcmp.lt.s32.totalorder %v306, 0
        %vm327 = vcmp.lt.s32.totalorder %v313, 0
        %vm328 = vcmp.lt.s32.totalorder %v320, 0
        %vm329 = vmand %vm325, %vm321
        %vm330 = vmand %vm326, %vm322
        %vm331 = vmand %vm327, %vm323
        %vm332 = vmand %vm328, %vm324
        %v333 = vadd.s32 %v299, 16
        %v334 = vadd.s32 %v306, 16
        %v335 = vadd.s32 %v313, 16
        %v336 = vadd.s32 %v320, 16
        %v337 = vsel %vm329, %v333, %v299
        %v338 = vsel %vm330, %v334, %v306
        %v339 = vsel %vm331, %v335, %v313
        %v340 = vsel %vm332, %v336, %v320
        %vm341 = vcmask 261120
        %342 = vst.msk [vmem:[#allocation2] sm:$0xff] %vm341, 0.0
        %343 = vst.msk [vmem:[#allocation2 + $0x8] sm:$0xff] %vm341, 0.0
        %344 = vst.msk [vmem:[#allocation2 + $0x10] sm:$0xff] %vm341, 0.0
        %345 = vst.msk [vmem:[#allocation2 + $0x18] sm:$0xff] %vm341, 0.0
        %346 = vst.msk [vmem:[#allocation2 + $0x20] sm:$0xff] %vm341, 0.0
        %v347 = vld [vmem:[%s276] sm:$0xff]
        %v348 = vld [vmem:[%s276 + $0x8] sm:$0xff]
        %v349 = vld [vmem:[%s276 + $0x10] sm:$0xff]
        %v350 = vld [vmem:[%s276 + $0x18] sm:$0xff]
        %vm355 = vcmask 1046528
        %v356 = vrot.slane %v347, 1
        %v357 = vrot.slane %v348, 1
        %v358 = vsel %vm355, %v356, %v357
        %v359 = vrot.slane %v349, 1
        %v360 = vsel %vm355, %v357, %v359
        %v361 = vrot.slane %v350, 1
        %v362 = vsel %vm355, %v359, %v361
        %363 = vrot.lane.b32.xlu0 %v358, 32
        %v364 = vpop.permute.xlu0 %363
        %365 = vrot.lane.b32.xlu0 %v360, 32
        %v366 = vpop.permute.xlu0 %365
        %367 = vrot.lane.b32.xlu0 %v362, 32
        %v368 = vpop.permute.xlu0 %367
        %369 = vrot.lane.b32.xlu0 %v361, 32
        %v370 = vpop.permute.xlu0 %369
        %vm375 = vcmask 1045504
        %v376 = vrot.slane %v347, 2
        %v377 = vrot.slane %v348, 2
        %v378 = vsel %vm375, %v376, %v377
        %v379 = vrot.slane %v349, 2
        %v380 = vsel %vm375, %v377, %v379
        %v381 = vrot.slane %v350, 2
        %v382 = vsel %vm375, %v379, %v381
        %383 = vrot.lane.b32.xlu0 %v378, 64
        %v384 = vpop.permute.xlu0 %383
        %385 = vrot.lane.b32.xlu0 %v380, 64
        %v386 = vpop.permute.xlu0 %385
        %387 = vrot.lane.b32.xlu0 %v382, 64
        %v388 = vpop.permute.xlu0 %387
        %389 = vrot.lane.b32.xlu0 %v381, 64
        %v390 = vpop.permute.xlu0 %389
        %v395 = vsel %vm341, %v347, %v364
        %v396 = vsel %vm341, %v348, %v366
        %v397 = vsel %vm341, %v349, %v368
        %v398 = vsel %vm341, %v350, %v370
        %vm399 = vcmask 523264
        %v400 = vsel %vm399, %v395, %v384
        %v401 = vsel %vm399, %v396, %v386
        %v402 = vsel %vm399, %v397, %v388
        %v403 = vsel %vm399, %v398, %v390
        %v404 = vld [vmem:[%s1] sm:$0xff]
        %v405 = vld [vmem:[%s1 + $0x8] sm:$0xff]
        %v406 = vld [vmem:[%s1 + $0x10] sm:$0xff]
        %v407 = vld [vmem:[%s1 + $0x18] sm:$0xff]
        %v408 = vld [vmem:[%s1 + $0x20] sm:$0xff]
        %v409 = vld [vmem:[%s1 + $0x28] sm:$0xff]
        %v410 = vld [vmem:[%s1 + $0x30] sm:$0xff]
        %v411 = vld [vmem:[%s1 + $0x38] sm:$0xff]
        %v412 = vld [vmem:[%s1 + $0x40] sm:$0xff]
        %v413 = vld [vmem:[%s1 + $0x48] sm:$0xff]
        %v414 = vld [vmem:[%s1 + $0x50] sm:$0xff]
        %v415 = vld [vmem:[%s1 + $0x58] sm:$0xff]
        %v416 = vld [vmem:[%s2] sm:$0x1]
        %v418 = vlaneseq
        %v419 = vshrl.u32 %v418, 7
        %v420 = vsub.s32 0, %v419
        %v421 = vrot.slane %v416, %v420
        %vm423 = vcmask 785408
        %v425 = vsel %vm423, %v400, 0
        %v428 = vsel %vm423, %v401, 0
        %v431 = vsel %vm423, %v402, 0
        %v434 = vsel %vm423, %v403, 0
        %436 = vmatprep.subr.mxu0 0.0
        %437 = vmatpush1.msra.mxu0 0.0
        %438 = vmatprep.subr.mxu0 0.0
        %439 = vmatpush1.msra.mxu0 0.0
        %440 = vmatprep.subr.mxu0 0.0
        %441 = vmatpush1.msra.mxu0 0.0
        %442 = vmatprep.subr.mxu0 0.0
        %443 = vmatpush1.msra.mxu0 0.0
        %444 = vmatprep.subr.mxu0 0.0
        %445 = vmatpush1.msra.mxu0 %v415
        %446 = vmatprep.subr.mxu0 0.0
        %447 = vmatpush1.msra.mxu0 %v414
        %448 = vmatprep.subr.mxu0 0.0
        %449 = vmatpush1.msra.mxu0 %v413
        %450 = vmatprep.subr.mxu0 0.0
        %451 = vmatpush1.msra.mxu0 %v412
        %452 = vmatprep.subr.mxu0 0.0
        %453 = vmatpush1.msra.mxu0 %v411
        %454 = vmatprep.subr.mxu0 0.0
        %455 = vmatpush1.msra.mxu0 %v410
        %456 = vmatprep.subr.mxu0 0.0
        %457 = vmatpush1.msra.mxu0 %v409
        %458 = vmatprep.subr.mxu0 0.0
        %459 = vmatpush1.msra.mxu0 %v408
        %460 = vmatprep.subr.mxu0 0.0
        %461 = vmatpush1.msra.mxu0 %v407
        %462 = vmatprep.subr.mxu0 0.0
        %463 = vmatpush1.msra.mxu0 %v406
        %464 = vmatprep.subr.mxu0 0.0
        %465 = vmatpush1.msra.mxu0 %v405
        %466 = vmatprep.subr.mxu0 0.0
        %467 = vmatpush1.msra.mxu0 %v404
        %468 = vmatprep.subr.mxu0 0.0
        %469 = vmatpush2.msra.mxu0 0.0
        %470 = vmatprep.subr.mxu0 0.0
        %471 = vmatpush2.msra.mxu0 0.0
        %472 = vmatprep.subr.mxu0 0.0
        %473 = vmatpush2.msra.mxu0 0.0
        %474 = vmatprep.subr.mxu0 0.0
        %475 = vmatpush2.msra.mxu0 0.0
        %476 = vmatprep.subr.mxu0 0.0
        %477 = vmatpush2.msra.mxu0 0.0
        %478 = vmatprep.subr.mxu0 0.0
        %479 = vmatpush2.msra.mxu0 0.0
        %480 = vmatprep.subr.mxu0 0.0
        %481 = vmatpush2.msra.mxu0 0.0
        %482 = vmatprep.subr.mxu0 0.0
        %483 = vmatpush2.msra.mxu0 0.0
        %484 = vmatprep.subr.mxu0 0.0
        %485 = vmatpush2.msra.mxu0 0.0
        %486 = vmatprep.subr.mxu0 0.0
        %487 = vmatpush2.msra.mxu0 0.0
        %488 = vmatprep.subr.mxu0 0.0
        %489 = vmatpush2.msra.mxu0 0.0
        %490 = vmatprep.subr.mxu0 0.0
        %491 = vmatpush2.msra.mxu0 0.0
        %492 = vmatprep.subr.mxu0 0.0
        %493 = vmatpush2.msra.mxu0 0.0
        %494 = vmatprep.subr.mxu0 0.0
        %495 = vmatpush2.msra.mxu0 0.0
        %496 = vmatprep.subr.mxu0 0.0
        %497 = vmatpush2.msra.mxu0 0.0
        %498 = vmatprep.subr.mxu0 0.0
        %499 = vmatpush2.msra.mxu0 0.0
        %500 = vmatprep.mubr.f32.mxu0 0.0
        %501 = vmatmul.mubr.f32.gmra.mxu0 %v425
        %v502 = vpop.f32.mrf.mxu0
        %v503 = vadd.f32 %v421, %v502
        %v504 = vpop.f32.mrf.mxu0
        %505 = vmatprep.mubr.f32.mxu0 0.0
        %506 = vmatmul.mubr.f32.gmra.mxu0 %v428
        %v507 = vpop.f32.mrf.mxu0
        %v508 = vadd.f32 %v421, %v507
        %v509 = vpop.f32.mrf.mxu0
        %510 = vmatprep.mubr.f32.mxu0 0.0
        %511 = vmatmul.mubr.f32.gmra.mxu0 %v431
        %v512 = vpop.f32.mrf.mxu0
        %v513 = vadd.f32 %v421, %v512
        %v514 = vpop.f32.mrf.mxu0
        %515 = vmatprep.mubr.f32.mxu0 0.0
        %516 = vmatmul.mubr.f32.gmra.mxu0 %v434
        %v517 = vpop.f32.mrf.mxu0
        %v518 = vadd.f32 %v421, %v517
        %v519 = vpop.f32.mrf.mxu0
        %520 = vdwg.mxu0
        %vm521 = vcmp.ge.s32.totalorder %v337, 1
        %vm522 = vcmp.ge.s32.totalorder %v338, 1
        %vm523 = vcmp.ge.s32.totalorder %v339, 1
        %vm524 = vcmp.ge.s32.totalorder %v340, 1
        %vm525 = vcmp.le.s32.totalorder %v337, 14
        %vm526 = vcmp.le.s32.totalorder %v338, 14
        %vm527 = vcmp.le.s32.totalorder %v339, 14
        %vm528 = vcmp.le.s32.totalorder %v340, 14
        %vm529 = vmand %vm521, %vm525
        %vm530 = vmand %vm522, %vm526
        %vm531 = vmand %vm523, %vm527
        %vm532 = vmand %vm524, %vm528
        %v533 = vsel %vm529, %v503, 0.0
        %v534 = vsel %vm530, %v508, 0.0
        %v535 = vsel %vm531, %v513, 0.0
        %v536 = vsel %vm532, %v518, 0.0
        %537 = vst.msk [vmem:[#allocation2 + $0x1] sm:$0xff] %vm341, %v533
        %538 = vst.msk [vmem:[#allocation2 + $0x9] sm:$0xff] %vm341, %v534
        %539 = vst.msk [vmem:[#allocation2 + $0x11] sm:$0xff] %vm341, %v535
        %vm540 = vcmask 259072
        %541 = vst.msk [vmem:[#allocation2 + $0x19] sm:$0x3f] %vm540, %v536
        %v542 = vld [vmem:[#allocation2] sm:$0xff]
        %v543 = vld [vmem:[#allocation2 + $0x8] sm:$0xff]
        %v544 = vld [vmem:[#allocation2 + $0x10] sm:$0xff]
        %v545 = vld [vmem:[#allocation2 + $0x18] sm:$0xff]
        %v546 = vld [vmem:[#allocation2 + $0x20] sm:$0x3]
        %v547 = vmax.f32 %v542, 0.0
        %v548 = vmax.f32 %v543, 0.0
        %v549 = vmax.f32 %v544, 0.0
        %v550 = vmax.f32 %v545, 0.0
        %v551 = vmax.f32 %v546, 0.0
        %v557 = vrot.slane %v547, 1
        %v558 = vrot.slane %v548, 1
        %v559 = vsel %vm355, %v557, %v558
        %v560 = vrot.slane %v549, 1
        %v561 = vsel %vm355, %v558, %v560
        %v562 = vrot.slane %v550, 1
        %v563 = vsel %vm355, %v560, %v562
        %v564 = vrot.slane %v551, 1
        %v565 = vsel %vm355, %v562, %v564
        %566 = vrot.lane.b32.xlu0 %v559, 32
        %v567 = vpop.permute.xlu0 %566
        %568 = vrot.lane.b32.xlu0 %v561, 32
        %v569 = vpop.permute.xlu0 %568
        %570 = vrot.lane.b32.xlu0 %v563, 32
        %v571 = vpop.permute.xlu0 %570
        %572 = vrot.lane.b32.xlu0 %v565, 32
        %v573 = vpop.permute.xlu0 %572
        %v578 = vrot.slane %v547, 2
        %v579 = vrot.slane %v548, 2
        %v580 = vsel %vm375, %v578, %v579
        %v581 = vrot.slane %v549, 2
        %v582 = vsel %vm375, %v579, %v581
        %v583 = vrot.slane %v550, 2
        %v584 = vsel %vm375, %v581, %v583
        %v585 = vrot.slane %v551, 2
        %v586 = vsel %vm375, %v583, %v585
        %587 = vrot.lane.b32.xlu0 %v580, 64
        %v588 = vpop.permute.xlu0 %587
        %589 = vrot.lane.b32.xlu0 %v582, 64
        %v590 = vpop.permute.xlu0 %589
        %591 = vrot.lane.b32.xlu0 %v584, 64
        %v592 = vpop.permute.xlu0 %591
        %593 = vrot.lane.b32.xlu0 %v586, 64
        %v594 = vpop.permute.xlu0 %593
        %v599 = vsel %vm341, %v547, %v567
        %v600 = vsel %vm341, %v548, %v569
        %v601 = vsel %vm341, %v549, %v571
        %v602 = vsel %vm341, %v550, %v573
        %v603 = vsel %vm399, %v599, %v588
        %v604 = vsel %vm399, %v600, %v590
        %v605 = vsel %vm399, %v601, %v592
        %v606 = vsel %vm399, %v602, %v594
        %v607 = vld [vmem:[%s3] sm:$0xff]
        %v608 = vld [vmem:[%s3 + $0x8] sm:$0xff]
        %v609 = vld [vmem:[%s3 + $0x10] sm:$0xff]
        %v610 = vld [vmem:[%s3 + $0x18] sm:$0xff]
        %v611 = vld [vmem:[%s3 + $0x20] sm:$0xff]
        %v612 = vld [vmem:[%s3 + $0x28] sm:$0xff]
        %v613 = vld [vmem:[%s3 + $0x30] sm:$0xff]
        %v614 = vld [vmem:[%s3 + $0x38] sm:$0xff]
        %v615 = vld [vmem:[%s3 + $0x40] sm:$0xff]
        %v616 = vld [vmem:[%s3 + $0x48] sm:$0xff]
        %v617 = vld [vmem:[%s3 + $0x50] sm:$0xff]
        %v618 = vld [vmem:[%s3 + $0x58] sm:$0xff]
        %v620 = vsel %vm423, %v603, 0
        %v623 = vsel %vm423, %v604, 0
        %v626 = vsel %vm423, %v605, 0
        %v629 = vsel %vm423, %v606, 0
        %631 = vmatprep.subr.mxu0 0.0
        %632 = vmatpush1.msra.mxu0 0.0
        %633 = vmatprep.subr.mxu0 0.0
        %634 = vmatpush1.msra.mxu0 0.0
        %635 = vmatprep.subr.mxu0 0.0
        %636 = vmatpush1.msra.mxu0 0.0
        %637 = vmatprep.subr.mxu0 0.0
        %638 = vmatpush1.msra.mxu0 0.0
        %639 = vmatprep.subr.mxu0 0.0
        %640 = vmatpush1.msra.mxu0 %v618
        %641 = vmatprep.subr.mxu0 0.0
        %642 = vmatpush1.msra.mxu0 %v617
        %643 = vmatprep.subr.mxu0 0.0
        %644 = vmatpush1.msra.mxu0 %v616
        %645 = vmatprep.subr.mxu0 0.0
        %646 = vmatpush1.msra.mxu0 %v615
        %647 = vmatprep.subr.mxu0 0.0
        %648 = vmatpush1.msra.mxu0 %v614
        %649 = vmatprep.subr.mxu0 0.0
        %650 = vmatpush1.msra.mxu0 %v613
        %651 = vmatprep.subr.mxu0 0.0
        %652 = vmatpush1.msra.mxu0 %v612
        %653 = vmatprep.subr.mxu0 0.0
        %654 = vmatpush1.msra.mxu0 %v611
        %655 = vmatprep.subr.mxu0 0.0
        %656 = vmatpush1.msra.mxu0 %v610
        %657 = vmatprep.subr.mxu0 0.0
        %658 = vmatpush1.msra.mxu0 %v609
        %659 = vmatprep.subr.mxu0 0.0
        %660 = vmatpush1.msra.mxu0 %v608
        %661 = vmatprep.subr.mxu0 0.0
        %662 = vmatpush1.msra.mxu0 %v607
        %663 = vmatprep.subr.mxu0 0.0
        %664 = vmatpush2.msra.mxu0 0.0
        %665 = vmatprep.subr.mxu0 0.0
        %666 = vmatpush2.msra.mxu0 0.0
        %667 = vmatprep.subr.mxu0 0.0
        %668 = vmatpush2.msra.mxu0 0.0
        %669 = vmatprep.subr.mxu0 0.0
        %670 = vmatpush2.msra.mxu0 0.0
        %671 = vmatprep.subr.mxu0 0.0
        %672 = vmatpush2.msra.mxu0 0.0
        %673 = vmatprep.subr.mxu0 0.0
        %674 = vmatpush2.msra.mxu0 0.0
        %675 = vmatprep.subr.mxu0 0.0
        %676 = vmatpush2.msra.mxu0 0.0
        %677 = vmatprep.subr.mxu0 0.0
        %678 = vmatpush2.msra.mxu0 0.0
        %679 = vmatprep.subr.mxu0 0.0
        %680 = vmatpush2.msra.mxu0 0.0
        %681 = vmatprep.subr.mxu0 0.0
        %682 = vmatpush2.msra.mxu0 0.0
        %683 = vmatprep.subr.mxu0 0.0
        %684 = vmatpush2.msra.mxu0 0.0
        %685 = vmatprep.subr.mxu0 0.0
        %686 = vmatpush2.msra.mxu0 0.0
        %687 = vmatprep.subr.mxu0 0.0
        %688 = vmatpush2.msra.mxu0 0.0
        %689 = vmatprep.subr.mxu0 0.0
        %690 = vmatpush2.msra.mxu0 0.0
        %691 = vmatprep.subr.mxu0 0.0
        %692 = vmatpush2.msra.mxu0 0.0
        %693 = vmatprep.subr.mxu0 0.0
        %694 = vmatpush2.msra.mxu0 0.0
        %695 = vmatprep.mubr.f32.mxu0 0.0
        %696 = vmatmul.mubr.f32.gmra.mxu0 %v620
        %v697 = vpop.f32.mrf.mxu0
        %v698 = vadd.f32 %v282, %v697
        %v699 = vpop.f32.mrf.mxu0
        %700 = vmatprep.mubr.f32.mxu0 0.0
        %701 = vmatmul.mubr.f32.gmra.mxu0 %v623
        %v702 = vpop.f32.mrf.mxu0
        %v703 = vadd.f32 %v282, %v702
        %v704 = vpop.f32.mrf.mxu0
        %705 = vmatprep.mubr.f32.mxu0 0.0
        %706 = vmatmul.mubr.f32.gmra.mxu0 %v626
        %v707 = vpop.f32.mrf.mxu0
        %v708 = vadd.f32 %v282, %v707
        %v709 = vpop.f32.mrf.mxu0
        %710 = vmatprep.mubr.f32.mxu0 0.0
        %711 = vmatmul.mubr.f32.gmra.mxu0 %v629
        %v712 = vpop.f32.mrf.mxu0
        %v713 = vadd.f32 %v282, %v712
        %v714 = vpop.f32.mrf.mxu0
        %715 = vdwg.mxu0
        %v716 = vsel %vm529, %v698, 0.0
        %v717 = vsel %vm530, %v703, 0.0
        %v718 = vsel %vm531, %v708, 0.0
        %v719 = vsel %vm532, %v713, 0.0
        %720 = vst.msk [vmem:[#allocation2 + $0x1] sm:$0xff] %vm341, %v716
        %721 = vst.msk [vmem:[#allocation2 + $0x9] sm:$0xff] %vm341, %v717
        %722 = vst.msk [vmem:[#allocation2 + $0x11] sm:$0xff] %vm341, %v718
        %723 = vst.msk [vmem:[#allocation2 + $0x19] sm:$0xff] %vm341, %v719
        %v724 = vld [vmem:[#allocation2] sm:$0xff]
        %v725 = vld [vmem:[#allocation2 + $0x8] sm:$0xff]
        %v726 = vld [vmem:[#allocation2 + $0x10] sm:$0xff]
        %v727 = vld [vmem:[#allocation2 + $0x18] sm:$0xff]
        %v728 = vld [vmem:[#allocation2 + $0x20] sm:$0x3]
        %v729 = vmax.f32 %v724, 0.0
        %v730 = vmax.f32 %v725, 0.0
        %v731 = vmax.f32 %v726, 0.0
        %v732 = vmax.f32 %v727, 0.0
        %v733 = vmax.f32 %v728, 0.0
        %v739 = vrot.slane %v729, 1
        %v740 = vrot.slane %v730, 1
        %v741 = vsel %vm355, %v739, %v740
        %v742 = vrot.slane %v731, 1
        %v743 = vsel %vm355, %v740, %v742
        %v744 = vrot.slane %v732, 1
        %v745 = vsel %vm355, %v742, %v744
        %v746 = vrot.slane %v733, 1
        %v747 = vsel %vm355, %v744, %v746
        %748 = vrot.lane.b32.xlu0 %v741, 32
        %v749 = vpop.permute.xlu0 %748
        %750 = vrot.lane.b32.xlu0 %v743, 32
        %v751 = vpop.permute.xlu0 %750
        %752 = vrot.lane.b32.xlu0 %v745, 32
        %v753 = vpop.permute.xlu0 %752
        %754 = vrot.lane.b32.xlu0 %v747, 32
        %v755 = vpop.permute.xlu0 %754
        %v760 = vrot.slane %v729, 2
        %v761 = vrot.slane %v730, 2
        %v762 = vsel %vm375, %v760, %v761
        %v763 = vrot.slane %v731, 2
        %v764 = vsel %vm375, %v761, %v763
        %v765 = vrot.slane %v732, 2
        %v766 = vsel %vm375, %v763, %v765
        %v767 = vrot.slane %v733, 2
        %v768 = vsel %vm375, %v765, %v767
        %769 = vrot.lane.b32.xlu0 %v762, 64
        %v770 = vpop.permute.xlu0 %769
        %771 = vrot.lane.b32.xlu0 %v764, 64
        %v772 = vpop.permute.xlu0 %771
        %773 = vrot.lane.b32.xlu0 %v766, 64
        %v774 = vpop.permute.xlu0 %773
        %775 = vrot.lane.b32.xlu0 %v768, 64
        %v776 = vpop.permute.xlu0 %775
        %v781 = vsel %vm341, %v729, %v749
        %v782 = vsel %vm341, %v730, %v751
        %v783 = vsel %vm341, %v731, %v753
        %v784 = vsel %vm341, %v732, %v755
        %v785 = vsel %vm399, %v781, %v770
        %v786 = vsel %vm399, %v782, %v772
        %v787 = vsel %vm399, %v783, %v774
        %v788 = vsel %vm399, %v784, %v776
        %v789 = vld [vmem:[%s3] sm:$0xff]
        %v790 = vld [vmem:[%s3 + $0x8] sm:$0xff]
        %v791 = vld [vmem:[%s3 + $0x10] sm:$0xff]
        %v792 = vld [vmem:[%s3 + $0x18] sm:$0xff]
        %v793 = vld [vmem:[%s3 + $0x20] sm:$0xff]
        %v794 = vld [vmem:[%s3 + $0x28] sm:$0xff]
        %v795 = vld [vmem:[%s3 + $0x30] sm:$0xff]
        %v796 = vld [vmem:[%s3 + $0x38] sm:$0xff]
        %v797 = vld [vmem:[%s3 + $0x40] sm:$0xff]
        %v798 = vld [vmem:[%s3 + $0x48] sm:$0xff]
        %v799 = vld [vmem:[%s3 + $0x50] sm:$0xff]
        %v800 = vld [vmem:[%s3 + $0x58] sm:$0xff]
        %v802 = vsel %vm423, %v785, 0
        %v805 = vsel %vm423, %v786, 0
        %v808 = vsel %vm423, %v787, 0
        %v811 = vsel %vm423, %v788, 0
        %813 = vmatprep.subr.mxu0 0.0
        %814 = vmatpush1.msra.mxu0 0.0
        %815 = vmatprep.subr.mxu0 0.0
        %816 = vmatpush1.msra.mxu0 0.0
        %817 = vmatprep.subr.mxu0 0.0
        %818 = vmatpush1.msra.mxu0 0.0
        %819 = vmatprep.subr.mxu0 0.0
        %820 = vmatpush1.msra.mxu0 0.0
        %821 = vmatprep.subr.mxu0 0.0
        %822 = vmatpush1.msra.mxu0 %v800
        %823 = vmatprep.subr.mxu0 0.0
        %824 = vmatpush1.msra.mxu0 %v799
        %825 = vmatprep.subr.mxu0 0.0
        %826 = vmatpush1.msra.mxu0 %v798
        %827 = vmatprep.subr.mxu0 0.0
        %828 = vmatpush1.msra.mxu0 %v797
        %829 = vmatprep.subr.mxu0 0.0
        %830 = vmatpush1.msra.mxu0 %v796
        %831 = vmatprep.subr.mxu0 0.0
        %832 = vmatpush1.msra.mxu0 %v795
        %833 = vmatprep.subr.mxu0 0.0
        %834 = vmatpush1.msra.mxu0 %v794
        %835 = vmatprep.subr.mxu0 0.0
        %836 = vmatpush1.msra.mxu0 %v793
        %837 = vmatprep.subr.mxu0 0.0
        %838 = vmatpush1.msra.mxu0 %v792
        %839 = vmatprep.subr.mxu0 0.0
        %840 = vmatpush1.msra.mxu0 %v791
        %841 = vmatprep.subr.mxu0 0.0
        %842 = vmatpush1.msra.mxu0 %v790
        %843 = vmatprep.subr.mxu0 0.0
        %844 = vmatpush1.msra.mxu0 %v789
        %845 = vmatprep.subr.mxu0 0.0
        %846 = vmatpush2.msra.mxu0 0.0
        %847 = vmatprep.subr.mxu0 0.0
        %848 = vmatpush2.msra.mxu0 0.0
        %849 = vmatprep.subr.mxu0 0.0
        %850 = vmatpush2.msra.mxu0 0.0
        %851 = vmatprep.subr.mxu0 0.0
        %852 = vmatpush2.msra.mxu0 0.0
        %853 = vmatprep.subr.mxu0 0.0
        %854 = vmatpush2.msra.mxu0 0.0
        %855 = vmatprep.subr.mxu0 0.0
        %856 = vmatpush2.msra.mxu0 0.0
        %857 = vmatprep.subr.mxu0 0.0
        %858 = vmatpush2.msra.mxu0 0.0
        %859 = vmatprep.subr.mxu0 0.0
        %860 = vmatpush2.msra.mxu0 0.0
        %861 = vmatprep.subr.mxu0 0.0
        %862 = vmatpush2.msra.mxu0 0.0
        %863 = vmatprep.subr.mxu0 0.0
        %864 = vmatpush2.msra.mxu0 0.0
        %865 = vmatprep.subr.mxu0 0.0
        %866 = vmatpush2.msra.mxu0 0.0
        %867 = vmatprep.subr.mxu0 0.0
        %868 = vmatpush2.msra.mxu0 0.0
        %869 = vmatprep.subr.mxu0 0.0
        %870 = vmatpush2.msra.mxu0 0.0
        %871 = vmatprep.subr.mxu0 0.0
        %872 = vmatpush2.msra.mxu0 0.0
        %873 = vmatprep.subr.mxu0 0.0
        %874 = vmatpush2.msra.mxu0 0.0
        %875 = vmatprep.subr.mxu0 0.0
        %876 = vmatpush2.msra.mxu0 0.0
        %877 = vmatprep.mubr.f32.mxu0 0.0
        %878 = vmatmul.mubr.f32.gmra.mxu0 %v802
        %v879 = vpop.f32.mrf.mxu0
        %v880 = vadd.f32 %v282, %v879
        %v881 = vpop.f32.mrf.mxu0
        %882 = vmatprep.mubr.f32.mxu0 0.0
        %883 = vmatmul.mubr.f32.gmra.mxu0 %v805
        %v884 = vpop.f32.mrf.mxu0
        %v885 = vadd.f32 %v282, %v884
        %v886 = vpop.f32.mrf.mxu0
        %887 = vmatprep.mubr.f32.mxu0 0.0
        %888 = vmatmul.mubr.f32.gmra.mxu0 %v808
        %v889 = vpop.f32.mrf.mxu0
        %v890 = vadd.f32 %v282, %v889
        %v891 = vpop.f32.mrf.mxu0
        %892 = vmatprep.mubr.f32.mxu0 0.0
        %893 = vmatmul.mubr.f32.gmra.mxu0 %v811
        %v894 = vpop.f32.mrf.mxu0
        %v895 = vadd.f32 %v282, %v894
        %v896 = vpop.f32.mrf.mxu0
        %897 = vdwg.mxu0
        %v898 = vsel %vm529, %v880, 0.0
        %v899 = vsel %vm530, %v885, 0.0
        %v900 = vsel %vm531, %v890, 0.0
        %v901 = vsel %vm532, %v895, 0.0
        %902 = vst.msk [vmem:[#allocation2 + $0x1] sm:$0xff] %vm341, %v898
        %903 = vst.msk [vmem:[#allocation2 + $0x9] sm:$0xff] %vm341, %v899
        %904 = vst.msk [vmem:[#allocation2 + $0x11] sm:$0xff] %vm341, %v900
        %905 = vst.msk [vmem:[#allocation2 + $0x19] sm:$0xff] %vm341, %v901
        %s906 = scalar_lea.vmem [#allocation2], 1
        %v907 = vld [vmem:[%s906] ss:$2 sm:$0x7f]
        %s908 = scalar_lea.vmem [#allocation2], 2
        %v909 = vld [vmem:[%s908] ss:$2 sm:$0x7f]
        %s910 = scalar_lea.vmem [#allocation2], 3
        %v911 = vld [vmem:[%s910] ss:$2 sm:$0x7f]
        %v912 = vmax.f32 %v907, %v909
        %v913 = vmax.f32 %v912, %v911
        %s914 = scalar_lea.vmem [#allocation2], 17
        %v915 = vld [vmem:[%s914] ss:$2 sm:$0x7f]
        %s916 = scalar_lea.vmem [#allocation2], 18
        %v917 = vld [vmem:[%s916] ss:$2 sm:$0x7f]
        %s918 = scalar_lea.vmem [#allocation2], 19
        %v919 = vld [vmem:[%s918] ss:$2 sm:$0x7f]
        %v920 = vmax.f32 %v915, %v917
        %v921 = vmax.f32 %v920, %v919
        %922 = vst.msk [vmem:[#allocation2] sm:$0xff] %vm341, 0.0
        %923 = vst.msk [vmem:[#allocation2 + $0x8] sm:$0xff] %vm341, 0.0
        %924 = vst.msk [vmem:[#allocation2 + $0x10] sm:$0xff] %vm341, 0.0
        %925 = vst.msk [vmem:[#allocation2 + $0x18] sm:$0xff] %vm341, 0.0
        %926 = vst.msk [vmem:[#allocation2 + $0x20] sm:$0xff] %vm341, 0.0
        %vm927 = vcmask 260096
        %928 = vst.msk [vmem:[#allocation2 + $0x1] sm:$0x7f] %vm927, %v913
        %929 = vst.msk [vmem:[#allocation2 + $0x11] sm:$0x7f] %vm927, %v921
        %v930 = vld [vmem:[#allocation2] sm:$0xff]
        %v931 = vld [vmem:[#allocation2 + $0x8] sm:$0xff]
        %v932 = vld [vmem:[#allocation2 + $0x10] sm:$0xff]
        %v933 = vld [vmem:[#allocation2 + $0x18] sm:$0xff]
        %v934 = vld [vmem:[#allocation2 + $0x20] sm:$0xff]
        %935 = vst.msk [vmem:[#allocation3] sm:$0xff] %vm341, %v930
        %936 = vst.msk [vmem:[#allocation3 + $0x8] sm:$0xff] %vm341, %v931
        %937 = vst.msk [vmem:[#allocation3 + $0x10] sm:$0xff] %vm341, %v932
        %938 = vst.msk [vmem:[#allocation3 + $0x18] sm:$0xff] %vm341, %v933
        %939 = vst.msk [vmem:[#allocation3 + $0x20] sm:$0xff] %vm341, %v934
        %v940 = vld [vmem:[#allocation2] sm:$0xff]
        %v941 = vld [vmem:[#allocation2 + $0x8] sm:$0xff]
        %v942 = vld [vmem:[#allocation2 + $0x10] sm:$0xff]
        %v943 = vld [vmem:[#allocation2 + $0x18] sm:$0xff]
        %v944 = vld [vmem:[#allocation2 + $0x20] sm:$0x3]
        %v945 = vmax.f32 %v940, 0.0
        %v946 = vmax.f32 %v941, 0.0
        %v947 = vmax.f32 %v942, 0.0
        %v948 = vmax.f32 %v943, 0.0
        %v949 = vmax.f32 %v944, 0.0
        %v955 = vrot.slane %v945, 1
        %v956 = vrot.slane %v946, 1
        %v957 = vsel %vm355, %v955, %v956
        %v958 = vrot.slane %v947, 1
        %v959 = vsel %vm355, %v956, %v958
        %v960 = vrot.slane %v948, 1
        %v961 = vsel %vm355, %v958, %v960
        %v962 = vrot.slane %v949, 1
        %v963 = vsel %vm355, %v960, %v962
        %964 = vrot.lane.b32.xlu0 %v957, 32
        %v965 = vpop.permute.xlu0 %964
        %966 = vrot.lane.b32.xlu0 %v959, 32
        %v967 = vpop.permute.xlu0 %966
        %968 = vrot.lane.b32.xlu0 %v961, 32
        %v969 = vpop.permute.xlu0 %968
        %970 = vrot.lane.b32.xlu0 %v963, 32
        %v971 = vpop.permute.xlu0 %970
        %v976 = vrot.slane %v945, 2
        %v977 = vrot.slane %v946, 2
        %v978 = vsel %vm375, %v976, %v977
        %v979 = vrot.slane %v947, 2
        %v980 = vsel %vm375, %v977, %v979
        %v981 = vrot.slane %v948, 2
        %v982 = vsel %vm375, %v979, %v981
        %v983 = vrot.slane %v949, 2
        %v984 = vsel %vm375, %v981, %v983
        %985 = vrot.lane.b32.xlu0 %v978, 64
        %v986 = vpop.permute.xlu0 %985
        %987 = vrot.lane.b32.xlu0 %v980, 64
        %v988 = vpop.permute.xlu0 %987
        %989 = vrot.lane.b32.xlu0 %v982, 64
        %v990 = vpop.permute.xlu0 %989
        %991 = vrot.lane.b32.xlu0 %v984, 64
        %v992 = vpop.permute.xlu0 %991
        %v997 = vsel %vm341, %v945, %v965
        %v998 = vsel %vm341, %v946, %v967
        %v999 = vsel %vm341, %v947, %v969
        %v1000 = vsel %vm341, %v948, %v971
        %v1001 = vsel %vm399, %v997, %v986
        %v1002 = vsel %vm399, %v998, %v988
        %v1003 = vsel %vm399, %v999, %v990
        %v1004 = vsel %vm399, %v1000, %v992
        %v1005 = vld [vmem:[%s3] sm:$0xff]
        %v1006 = vld [vmem:[%s3 + $0x8] sm:$0xff]
        %v1007 = vld [vmem:[%s3 + $0x10] sm:$0xff]
        %v1008 = vld [vmem:[%s3 + $0x18] sm:$0xff]
        %v1009 = vld [vmem:[%s3 + $0x20] sm:$0xff]
        %v1010 = vld [vmem:[%s3 + $0x28] sm:$0xff]
        %v1011 = vld [vmem:[%s3 + $0x30] sm:$0xff]
        %v1012 = vld [vmem:[%s3 + $0x38] sm:$0xff]
        %v1013 = vld [vmem:[%s3 + $0x40] sm:$0xff]
        %v1014 = vld [vmem:[%s3 + $0x48] sm:$0xff]
        %v1015 = vld [vmem:[%s3 + $0x50] sm:$0xff]
        %v1016 = vld [vmem:[%s3 + $0x58] sm:$0xff]
        %v1018 = vsel %vm423, %v1001, 0
        %v1021 = vsel %vm423, %v1002, 0
        %v1024 = vsel %vm423, %v1003, 0
        %v1027 = vsel %vm423, %v1004, 0
        %1029 = vmatprep.subr.mxu0 0.0
        %1030 = vmatpush1.msra.mxu0 0.0
        %1031 = vmatprep.subr.mxu0 0.0
        %1032 = vmatpush1.msra.mxu0 0.0
        %1033 = vmatprep.subr.mxu0 0.0
        %1034 = vmatpush1.msra.mxu0 0.0
        %1035 = vmatprep.subr.mxu0 0.0
        %1036 = vmatpush1.msra.mxu0 0.0
        %1037 = vmatprep.subr.mxu0 0.0
        %1038 = vmatpush1.msra.mxu0 %v1016
        %1039 = vmatprep.subr.mxu0 0.0
        %1040 = vmatpush1.msra.mxu0 %v1015
        %1041 = vmatprep.subr.mxu0 0.0
        %1042 = vmatpush1.msra.mxu0 %v1014
        %1043 = vmatprep.subr.mxu0 0.0
        %1044 = vmatpush1.msra.mxu0 %v1013
        %1045 = vmatprep.subr.mxu0 0.0
        %1046 = vmatpush1.msra.mxu0 %v1012
        %1047 = vmatprep.subr.mxu0 0.0
        %1048 = vmatpush1.msra.mxu0 %v1011
        %1049 = vmatprep.subr.mxu0 0.0
        %1050 = vmatpush1.msra.mxu0 %v1010
        %1051 = vmatprep.subr.mxu0 0.0
        %1052 = vmatpush1.msra.mxu0 %v1009
        %1053 = vmatprep.subr.mxu0 0.0
        %1054 = vmatpush1.msra.mxu0 %v1008
        %1055 = vmatprep.subr.mxu0 0.0
        %1056 = vmatpush1.msra.mxu0 %v1007
        %1057 = vmatprep.subr.mxu0 0.0
        %1058 = vmatpush1.msra.mxu0 %v1006
        %1059 = vmatprep.subr.mxu0 0.0
        %1060 = vmatpush1.msra.mxu0 %v1005
        %1061 = vmatprep.subr.mxu0 0.0
        %1062 = vmatpush2.msra.mxu0 0.0
        %1063 = vmatprep.subr.mxu0 0.0
        %1064 = vmatpush2.msra.mxu0 0.0
        %1065 = vmatprep.subr.mxu0 0.0
        %1066 = vmatpush2.msra.mxu0 0.0
        %1067 = vmatprep.subr.mxu0 0.0
        %1068 = vmatpush2.msra.mxu0 0.0
        %1069 = vmatprep.subr.mxu0 0.0
        %1070 = vmatpush2.msra.mxu0 0.0
        %1071 = vmatprep.subr.mxu0 0.0
        %1072 = vmatpush2.msra.mxu0 0.0
        %1073 = vmatprep.subr.mxu0 0.0
        %1074 = vmatpush2.msra.mxu0 0.0
        %1075 = vmatprep.subr.mxu0 0.0
        %1076 = vmatpush2.msra.mxu0 0.0
        %1077 = vmatprep.subr.mxu0 0.0
        %1078 = vmatpush2.msra.mxu0 0.0
        %1079 = vmatprep.subr.mxu0 0.0
        %1080 = vmatpush2.msra.mxu0 0.0
        %1081 = vmatprep.subr.mxu0 0.0
        %1082 = vmatpush2.msra.mxu0 0.0
        %1083 = vmatprep.subr.mxu0 0.0
        %1084 = vmatpush2.msra.mxu0 0.0
        %1085 = vmatprep.subr.mxu0 0.0
        %1086 = vmatpush2.msra.mxu0 0.0
        %1087 = vmatprep.subr.mxu0 0.0
        %1088 = vmatpush2.msra.mxu0 0.0
        %1089 = vmatprep.subr.mxu0 0.0
        %1090 = vmatpush2.msra.mxu0 0.0
        %1091 = vmatprep.subr.mxu0 0.0
        %1092 = vmatpush2.msra.mxu0 0.0
        %1093 = vmatprep.mubr.f32.mxu0 0.0
        %1094 = vmatmul.mubr.f32.gmra.mxu0 %v1018
        %v1095 = vpop.f32.mrf.mxu0
        %v1096 = vadd.f32 %v282, %v1095
        %v1097 = vpop.f32.mrf.mxu0
        %1098 = vmatprep.mubr.f32.mxu0 0.0
        %1099 = vmatmul.mubr.f32.gmra.mxu0 %v1021
        %v1100 = vpop.f32.mrf.mxu0
        %v1101 = vadd.f32 %v282, %v1100
        %v1102 = vpop.f32.mrf.mxu0
        %1103 = vmatprep.mubr.f32.mxu0 0.0
        %1104 = vmatmul.mubr.f32.gmra.mxu0 %v1024
        %v1105 = vpop.f32.mrf.mxu0
        %v1106 = vadd.f32 %v282, %v1105
        %v1107 = vpop.f32.mrf.mxu0
        %1108 = vmatprep.mubr.f32.mxu0 0.0
        %1109 = vmatmul.mubr.f32.gmra.mxu0 %v1027
        %v1110 = vpop.f32.mrf.mxu0
        %v1111 = vadd.f32 %v282, %v1110
        %v1112 = vpop.f32.mrf.mxu0
        %1113 = vdwg.mxu0
        %vm1114 = vcmp.le.s32.totalorder %v337, 7
        %vm1115 = vcmp.le.s32.totalorder %v338, 7
        %vm1116 = vcmp.le.s32.totalorder %v339, 7
        %vm1117 = vcmp.le.s32.totalorder %v340, 7
        %vm1118 = vmand %vm521, %vm1114
        %vm1119 = vmand %vm522, %vm1115
        %vm1120 = vmand %vm523, %vm1116
        %vm1121 = vmand %vm524, %vm1117
        %v1122 = vsel %vm1118, %v1096, 0.0
        %v1123 = vsel %vm1119, %v1101, 0.0
        %v1124 = vsel %vm1120, %v1106, 0.0
        %v1125 = vsel %vm1121, %v1111, 0.0
        %1126 = vst.msk [vmem:[#allocation2 + $0x1] sm:$0xff] %vm341, %v1122
        %1127 = vst.msk [vmem:[#allocation2 + $0x9] sm:$0xff] %vm341, %v1123
        %1128 = vst.msk [vmem:[#allocation2 + $0x11] sm:$0xff] %vm341, %v1124
        %1129 = vst.msk [vmem:[#allocation2 + $0x19] sm:$0xff] %vm341, %v1125
        %v1130 = vld [vmem:[#allocation2] sm:$0xff]
        %v1131 = vld [vmem:[#allocation2 + $0x8] sm:$0xff]
        %v1132 = vld [vmem:[#allocation2 + $0x10] sm:$0xff]
        %v1133 = vld [vmem:[#allocation2 + $0x18] sm:$0xff]
        %v1134 = vld [vmem:[#allocation2 + $0x20] sm:$0x3]
        %v1135 = vmax.f32 %v1130, 0.0
        %v1136 = vmax.f32 %v1131, 0.0
        %v1137 = vmax.f32 %v1132, 0.0
        %v1138 = vmax.f32 %v1133, 0.0
        %v1139 = vmax.f32 %v1134, 0.0
        %v1145 = vrot.slane %v1135, 1
        %v1146 = vrot.slane %v1136, 1
        %v1147 = vsel %vm355, %v1145, %v1146
        %v1148 = vrot.slane %v1137, 1
        %v1149 = vsel %vm355, %v1146, %v1148
        %v1150 = vrot.slane %v1138, 1
        %v1151 = vsel %vm355, %v1148, %v1150
        %v1152 = vrot.slane %v1139, 1
        %v1153 = vsel %vm355, %v1150, %v1152
        %1154 = vrot.lane.b32.xlu0 %v1147, 32
        %v1155 = vpop.permute.xlu0 %1154
        %1156 = vrot.lane.b32.xlu0 %v1149, 32
        %v1157 = vpop.permute.xlu0 %1156
        %1158 = vrot.lane.b32.xlu0 %v1151, 32
        %v1159 = vpop.permute.xlu0 %1158
        %1160 = vrot.lane.b32.xlu0 %v1153, 32
        %v1161 = vpop.permute.xlu0 %1160
        %v1166 = vrot.slane %v1135, 2
        %v1167 = vrot.slane %v1136, 2
        %v1168 = vsel %vm375, %v1166, %v1167
        %v1169 = vrot.slane %v1137, 2
        %v1170 = vsel %vm375, %v1167, %v1169
        %v1171 = vrot.slane %v1138, 2
        %v1172 = vsel %vm375, %v1169, %v1171
        %v1173 = vrot.slane %v1139, 2
        %v1174 = vsel %vm375, %v1171, %v1173
        %1175 = vrot.lane.b32.xlu0 %v1168, 64
        %v1176 = vpop.permute.xlu0 %1175
        %1177 = vrot.lane.b32.xlu0 %v1170, 64
        %v1178 = vpop.permute.xlu0 %1177
        %1179 = vrot.lane.b32.xlu0 %v1172, 64
        %v1180 = vpop.permute.xlu0 %1179
        %1181 = vrot.lane.b32.xlu0 %v1174, 64
        %v1182 = vpop.permute.xlu0 %1181
        %v1187 = vsel %vm341, %v1135, %v1155
        %v1188 = vsel %vm341, %v1136, %v1157
        %v1189 = vsel %vm341, %v1137, %v1159
        %v1190 = vsel %vm341, %v1138, %v1161
        %v1191 = vsel %vm399, %v1187, %v1176
        %v1192 = vsel %vm399, %v1188, %v1178
        %v1193 = vsel %vm399, %v1189, %v1180
        %v1194 = vsel %vm399, %v1190, %v1182
        %v1195 = vld [vmem:[%s3] sm:$0xff]
        %v1196 = vld [vmem:[%s3 + $0x8] sm:$0xff]
        %v1197 = vld [vmem:[%s3 + $0x10] sm:$0xff]
        %v1198 = vld [vmem:[%s3 + $0x18] sm:$0xff]
        %v1199 = vld [vmem:[%s3 + $0x20] sm:$0xff]
        %v1200 = vld [vmem:[%s3 + $0x28] sm:$0xff]
        %v1201 = vld [vmem:[%s3 + $0x30] sm:$0xff]
        %v1202 = vld [vmem:[%s3 + $0x38] sm:$0xff]
        %v1203 = vld [vmem:[%s3 + $0x40] sm:$0xff]
        %v1204 = vld [vmem:[%s3 + $0x48] sm:$0xff]
        %v1205 = vld [vmem:[%s3 + $0x50] sm:$0xff]
        %v1206 = vld [vmem:[%s3 + $0x58] sm:$0xff]
        %v1208 = vsel %vm423, %v1191, 0
        %v1211 = vsel %vm423, %v1192, 0
        %v1214 = vsel %vm423, %v1193, 0
        %v1217 = vsel %vm423, %v1194, 0
        %1219 = vmatprep.subr.mxu0 0.0
        %1220 = vmatpush1.msra.mxu0 0.0
        %1221 = vmatprep.subr.mxu0 0.0
        %1222 = vmatpush1.msra.mxu0 0.0
        %1223 = vmatprep.subr.mxu0 0.0
        %1224 = vmatpush1.msra.mxu0 0.0
        %1225 = vmatprep.subr.mxu0 0.0
        %1226 = vmatpush1.msra.mxu0 0.0
        %1227 = vmatprep.subr.mxu0 0.0
        %1228 = vmatpush1.msra.mxu0 %v1206
        %1229 = vmatprep.subr.mxu0 0.0
        %1230 = vmatpush1.msra.mxu0 %v1205
        %1231 = vmatprep.subr.mxu0 0.0
        %1232 = vmatpush1.msra.mxu0 %v1204
        %1233 = vmatprep.subr.mxu0 0.0
        %1234 = vmatpush1.msra.mxu0 %v1203
        %1235 = vmatprep.subr.mxu0 0.0
        %1236 = vmatpush1.msra.mxu0 %v1202
        %1237 = vmatprep.subr.mxu0 0.0
        %1238 = vmatpush1.msra.mxu0 %v1201
        %1239 = vmatprep.subr.mxu0 0.0
        %1240 = vmatpush1.msra.mxu0 %v1200
        %1241 = vmatprep.subr.mxu0 0.0
        %1242 = vmatpush1.msra.mxu0 %v1199
        %1243 = vmatprep.subr.mxu0 0.0
        %1244 = vmatpush1.msra.mxu0 %v1198
        %1245 = vmatprep.subr.mxu0 0.0
        %1246 = vmatpush1.msra.mxu0 %v1197
        %1247 = vmatprep.subr.mxu0 0.0
        %1248 = vmatpush1.msra.mxu0 %v1196
        %1249 = vmatprep.subr.mxu0 0.0
        %1250 = vmatpush1.msra.mxu0 %v1195
        %1251 = vmatprep.subr.mxu0 0.0
        %1252 = vmatpush2.msra.mxu0 0.0
        %1253 = vmatprep.subr.mxu0 0.0
        %1254 = vmatpush2.msra.mxu0 0.0
        %1255 = vmatprep.subr.mxu0 0.0
        %1256 = vmatpush2.msra.mxu0 0.0
        %1257 = vmatprep.subr.mxu0 0.0
        %1258 = vmatpush2.msra.mxu0 0.0
        %1259 = vmatprep.subr.mxu0 0.0
        %1260 = vmatpush2.msra.mxu0 0.0
        %1261 = vmatprep.subr.mxu0 0.0
        %1262 = vmatpush2.msra.mxu0 0.0
        %1263 = vmatprep.subr.mxu0 0.0
        %1264 = vmatpush2.msra.mxu0 0.0
        %1265 = vmatprep.subr.mxu0 0.0
        %1266 = vmatpush2.msra.mxu0 0.0
        %1267 = vmatprep.subr.mxu0 0.0
        %1268 = vmatpush2.msra.mxu0 0.0
        %1269 = vmatprep.subr.mxu0 0.0
        %1270 = vmatpush2.msra.mxu0 0.0
        %1271 = vmatprep.subr.mxu0 0.0
        %1272 = vmatpush2.msra.mxu0 0.0
        %1273 = vmatprep.subr.mxu0 0.0
        %1274 = vmatpush2.msra.mxu0 0.0
        %1275 = vmatprep.subr.mxu0 0.0
        %1276 = vmatpush2.msra.mxu0 0.0
        %1277 = vmatprep.subr.mxu0 0.0
        %1278 = vmatpush2.msra.mxu0 0.0
        %1279 = vmatprep.subr.mxu0 0.0
        %1280 = vmatpush2.msra.mxu0 0.0
        %1281 = vmatprep.subr.mxu0 0.0
        %1282 = vmatpush2.msra.mxu0 0.0
        %1283 = vmatprep.mubr.f32.mxu0 0.0
        %1284 = vmatmul.mubr.f32.gmra.mxu0 %v1208
        %v1285 = vpop.f32.mrf.mxu0
        %v1286 = vadd.f32 %v282, %v1285
        %v1287 = vpop.f32.mrf.mxu0
        %1288 = vmatprep.mubr.f32.mxu0 0.0
        %1289 = vmatmul.mubr.f32.gmra.mxu0 %v1211
        %v1290 = vpop.f32.mrf.mxu0
        %v1291 = vadd.f32 %v282, %v1290
        %v1292 = vpop.f32.mrf.mxu0
        %1293 = vmatprep.mubr.f32.mxu0 0.0
        %1294 = vmatmul.mubr.f32.gmra.mxu0 %v1214
        %v1295 = vpop.f32.mrf.mxu0
        %v1296 = vadd.f32 %v282, %v1295
        %v1297 = vpop.f32.mrf.mxu0
        %1298 = vmatprep.mubr.f32.mxu0 0.0
        %1299 = vmatmul.mubr.f32.gmra.mxu0 %v1217
        %v1300 = vpop.f32.mrf.mxu0
        %v1301 = vadd.f32 %v282, %v1300
        %v1302 = vpop.f32.mrf.mxu0
        %1303 = vdwg.mxu0
        %v1304 = vsel %vm1118, %v1286, 0.0
        %v1305 = vsel %vm1119, %v1291, 0.0
        %v1306 = vsel %vm1120, %v1296, 0.0
        %v1307 = vsel %vm1121, %v1301, 0.0
        %v1308 = vld [vmem:[#allocation3 + $0x1] sm:$0xff]
        %v1309 = vld [vmem:[#allocation3 + $0x9] sm:$0xff]
        %v1310 = vld [vmem:[#allocation3 + $0x11] sm:$0xff]
        %v1311 = vld [vmem:[#allocation3 + $0x19] sm:$0xff]
        %v1312 = vadd.f32 %v1304, %v1308
        %v1313 = vadd.f32 %v1305, %v1309
        %v1314 = vadd.f32 %v1306, %v1310
        %v1315 = vadd.f32 %v1307, %v1311
        %1316 = vst.msk [vmem:[#allocation2 + $0x1] sm:$0xff] %vm341, %v1312
        %1317 = vst.msk [vmem:[#allocation2 + $0x9] sm:$0xff] %vm341, %v1313
        %1318 = vst.msk [vmem:[#allocation2 + $0x11] sm:$0xff] %vm341, %v1314
        %1319 = vst.msk [vmem:[#allocation2 + $0x19] sm:$0xff] %vm341, %v1315
        %v1320 = vld [vmem:[%s906] ss:$2 sm:$0x7]
        %v1321 = vld [vmem:[%s908] ss:$2 sm:$0x7]
        %v1322 = vld [vmem:[%s910] ss:$2 sm:$0x7]
        %v1323 = vmax.f32 %v1320, %v1321
        %v1324 = vmax.f32 %v1323, %v1322
        %v1325 = vld [vmem:[%s914] ss:$2 sm:$0x7]
        %v1326 = vld [vmem:[%s916] ss:$2 sm:$0x7]
        %v1327 = vld [vmem:[%s918] ss:$2 sm:$0x7]
        %v1328 = vmax.f32 %v1325, %v1326
        %v1329 = vmax.f32 %v1328, %v1327
        %1330 = vst.msk [vmem:[#allocation2] sm:$0xff] %vm341, 0.0
        %1331 = vst.msk [vmem:[#allocation2 + $0x8] sm:$0xff] %vm341, 0.0
        %1332 = vst.msk [vmem:[#allocation2 + $0x10] sm:$0xff] %vm341, 0.0
        %1333 = vst.msk [vmem:[#allocation2 + $0x18] sm:$0xff] %vm341, 0.0
        %1334 = vst.msk [vmem:[#allocation2 + $0x20] sm:$0xff] %vm341, 0.0
        %vm1335 = vcmask 256000
        %1336 = vst.msk [vmem:[#allocation2 + $0x1] sm:$0x7] %vm1335, %v1324
        %1337 = vst.msk [vmem:[#allocation2 + $0x11] sm:$0x7] %vm1335, %v1329
        %v1338 = vld [vmem:[#allocation2] sm:$0xff]
        %v1339 = vld [vmem:[#allocation2 + $0x8] sm:$0xff]
        %v1340 = vld [vmem:[#allocation2 + $0x10] sm:$0xff]
        %v1341 = vld [vmem:[#allocation2 + $0x18] sm:$0xff]
        %v1342 = vld [vmem:[#allocation2 + $0x20] sm:$0xff]
        %1343 = vst.msk [vmem:[#allocation3] sm:$0xff] %vm341, %v1338
        %1344 = vst.msk [vmem:[#allocation3 + $0x8] sm:$0xff] %vm341, %v1339
        %1345 = vst.msk [vmem:[#allocation3 + $0x10] sm:$0xff] %vm341, %v1340
        %1346 = vst.msk [vmem:[#allocation3 + $0x18] sm:$0xff] %vm341, %v1341
        %1347 = vst.msk [vmem:[#allocation3 + $0x20] sm:$0xff] %vm341, %v1342
        %v1348 = vld [vmem:[#allocation2] sm:$0xff]
        %v1349 = vld [vmem:[#allocation2 + $0x8] sm:$0xff]
        %v1350 = vld [vmem:[#allocation2 + $0x10] sm:$0xff]
        %v1351 = vld [vmem:[#allocation2 + $0x18] sm:$0xff]
        %v1352 = vld [vmem:[#allocation2 + $0x20] sm:$0x3]
        %v1353 = vmax.f32 %v1348, 0.0
        %v1354 = vmax.f32 %v1349, 0.0
        %v1355 = vmax.f32 %v1350, 0.0
        %v1356 = vmax.f32 %v1351, 0.0
        %v1357 = vmax.f32 %v1352, 0.0
        %v1363 = vrot.slane %v1353, 1
        %v1364 = vrot.slane %v1354, 1
        %v1365 = vsel %vm355, %v1363, %v1364
        %v1366 = vrot.slane %v1355, 1
        %v1367 = vsel %vm355, %v1364, %v1366
        %v1368 = vrot.slane %v1356, 1
        %v1369 = vsel %vm355, %v1366, %v1368
        %v1370 = vrot.slane %v1357, 1
        %v1371 = vsel %vm355, %v1368, %v1370
        %1372 = vrot.lane.b32.xlu0 %v1365, 32
        %v1373 = vpop.permute.xlu0 %1372
        %1374 = vrot.lane.b32.xlu0 %v1367, 32
        %v1375 = vpop.permute.xlu0 %1374
        %1376 = vrot.lane.b32.xlu0 %v1369, 32
        %v1377 = vpop.permute.xlu0 %1376
        %1378 = vrot.lane.b32.xlu0 %v1371, 32
        %v1379 = vpop.permute.xlu0 %1378
        %v1384 = vrot.slane %v1353, 2
        %v1385 = vrot.slane %v1354, 2
        %v1386 = vsel %vm375, %v1384, %v1385
        %v1387 = vrot.slane %v1355, 2
        %v1388 = vsel %vm375, %v1385, %v1387
        %v1389 = vrot.slane %v1356, 2
        %v1390 = vsel %vm375, %v1387, %v1389
        %v1391 = vrot.slane %v1357, 2
        %v1392 = vsel %vm375, %v1389, %v1391
        %1393 = vrot.lane.b32.xlu0 %v1386, 64
        %v1394 = vpop.permute.xlu0 %1393
        %1395 = vrot.lane.b32.xlu0 %v1388, 64
        %v1396 = vpop.permute.xlu0 %1395
        %1397 = vrot.lane.b32.xlu0 %v1390, 64
        %v1398 = vpop.permute.xlu0 %1397
        %1399 = vrot.lane.b32.xlu0 %v1392, 64
        %v1400 = vpop.permute.xlu0 %1399
        %v1405 = vsel %vm341, %v1353, %v1373
        %v1406 = vsel %vm341, %v1354, %v1375
        %v1407 = vsel %vm341, %v1355, %v1377
        %v1408 = vsel %vm341, %v1356, %v1379
        %v1409 = vsel %vm399, %v1405, %v1394
        %v1410 = vsel %vm399, %v1406, %v1396
        %v1411 = vsel %vm399, %v1407, %v1398
        %v1412 = vsel %vm399, %v1408, %v1400
        %v1413 = vld [vmem:[%s3] sm:$0xff]
        %v1414 = vld [vmem:[%s3 + $0x8] sm:$0xff]
        %v1415 = vld [vmem:[%s3 + $0x10] sm:$0xff]
        %v1416 = vld [vmem:[%s3 + $0x18] sm:$0xff]
        %v1417 = vld [vmem:[%s3 + $0x20] sm:$0xff]
        %v1418 = vld [vmem:[%s3 + $0x28] sm:$0xff]
        %v1419 = vld [vmem:[%s3 + $0x30] sm:$0xff]
        %v1420 = vld [vmem:[%s3 + $0x38] sm:$0xff]
        %v1421 = vld [vmem:[%s3 + $0x40] sm:$0xff]
        %v1422 = vld [vmem:[%s3 + $0x48] sm:$0xff]
        %v1423 = vld [vmem:[%s3 + $0x50] sm:$0xff]
        %v1424 = vld [vmem:[%s3 + $0x58] sm:$0xff]
        %v1426 = vsel %vm423, %v1409, 0
        %v1429 = vsel %vm423, %v1410, 0
        %v1432 = vsel %vm423, %v1411, 0
        %v1435 = vsel %vm423, %v1412, 0
        %1437 = vmatprep.subr.mxu0 0.0
        %1438 = vmatpush1.msra.mxu0 0.0
        %1439 = vmatprep.subr.mxu0 0.0
        %1440 = vmatpush1.msra.mxu0 0.0
        %1441 = vmatprep.subr.mxu0 0.0
        %1442 = vmatpush1.msra.mxu0 0.0
        %1443 = vmatprep.subr.mxu0 0.0
        %1444 = vmatpush1.msra.mxu0 0.0
        %1445 = vmatprep.subr.mxu0 0.0
        %1446 = vmatpush1.msra.mxu0 %v1424
        %1447 = vmatprep.subr.mxu0 0.0
        %1448 = vmatpush1.msra.mxu0 %v1423
        %1449 = vmatprep.subr.mxu0 0.0
        %1450 = vmatpush1.msra.mxu0 %v1422
        %1451 = vmatprep.subr.mxu0 0.0
        %1452 = vmatpush1.msra.mxu0 %v1421
        %1453 = vmatprep.subr.mxu0 0.0
        %1454 = vmatpush1.msra.mxu0 %v1420
        %1455 = vmatprep.subr.mxu0 0.0
        %1456 = vmatpush1.msra.mxu0 %v1419
        %1457 = vmatprep.subr.mxu0 0.0
        %1458 = vmatpush1.msra.mxu0 %v1418
        %1459 = vmatprep.subr.mxu0 0.0
        %1460 = vmatpush1.msra.mxu0 %v1417
        %1461 = vmatprep.subr.mxu0 0.0
        %1462 = vmatpush1.msra.mxu0 %v1416
        %1463 = vmatprep.subr.mxu0 0.0
        %1464 = vmatpush1.msra.mxu0 %v1415
        %1465 = vmatprep.subr.mxu0 0.0
        %1466 = vmatpush1.msra.mxu0 %v1414
        %1467 = vmatprep.subr.mxu0 0.0
        %1468 = vmatpush1.msra.mxu0 %v1413
        %1469 = vmatprep.subr.mxu0 0.0
        %1470 = vmatpush2.msra.mxu0 0.0
        %1471 = vmatprep.subr.mxu0 0.0
        %1472 = vmatpush2.msra.mxu0 0.0
        %1473 = vmatprep.subr.mxu0 0.0
        %1474 = vmatpush2.msra.mxu0 0.0
        %1475 = vmatprep.subr.mxu0 0.0
        %1476 = vmatpush2.msra.mxu0 0.0
        %1477 = vmatprep.subr.mxu0 0.0
        %1478 = vmatpush2.msra.mxu0 0.0
        %1479 = vmatprep.subr.mxu0 0.0
        %1480 = vmatpush2.msra.mxu0 0.0
        %1481 = vmatprep.subr.mxu0 0.0
        %1482 = vmatpush2.msra.mxu0 0.0
        %1483 = vmatprep.subr.mxu0 0.0
        %1484 = vmatpush2.msra.mxu0 0.0
        %1485 = vmatprep.subr.mxu0 0.0
        %1486 = vmatpush2.msra.mxu0 0.0
        %1487 = vmatprep.subr.mxu0 0.0
        %1488 = vmatpush2.msra.mxu0 0.0
        %1489 = vmatprep.subr.mxu0 0.0
        %1490 = vmatpush2.msra.mxu0 0.0
        %1491 = vmatprep.subr.mxu0 0.0
        %1492 = vmatpush2.msra.mxu0 0.0
        %1493 = vmatprep.subr.mxu0 0.0
        %1494 = vmatpush2.msra.mxu0 0.0
        %1495 = vmatprep.subr.mxu0 0.0
        %1496 = vmatpush2.msra.mxu0 0.0
        %1497 = vmatprep.subr.mxu0 0.0
        %1498 = vmatpush2.msra.mxu0 0.0
        %1499 = vmatprep.subr.mxu0 0.0
        %1500 = vmatpush2.msra.mxu0 0.0
        %1501 = vmatprep.mubr.f32.mxu0 0.0
        %1502 = vmatmul.mubr.f32.gmra.mxu0 %v1426
        %v1503 = vpop.f32.mrf.mxu0
        %v1504 = vadd.f32 %v282, %v1503
        %v1505 = vpop.f32.mrf.mxu0
        %1506 = vmatprep.mubr.f32.mxu0 0.0
        %1507 = vmatmul.mubr.f32.gmra.mxu0 %v1429
        %v1508 = vpop.f32.mrf.mxu0
        %v1509 = vadd.f32 %v282, %v1508
        %v1510 = vpop.f32.mrf.mxu0
        %1511 = vmatprep.mubr.f32.mxu0 0.0
        %1512 = vmatmul.mubr.f32.gmra.mxu0 %v1432
        %v1513 = vpop.f32.mrf.mxu0
        %v1514 = vadd.f32 %v282, %v1513
        %v1515 = vpop.f32.mrf.mxu0
        %1516 = vmatprep.mubr.f32.mxu0 0.0
        %1517 = vmatmul.mubr.f32.gmra.mxu0 %v1435
        %v1518 = vpop.f32.mrf.mxu0
        %v1519 = vadd.f32 %v282, %v1518
        %v1520 = vpop.f32.mrf.mxu0
        %1521 = vdwg.mxu0
        %vm1522 = vcmp.le.s32.totalorder %v337, 3
        %vm1523 = vcmp.le.s32.totalorder %v338, 3
        %vm1524 = vcmp.le.s32.totalorder %v339, 3
        %vm1525 = vcmp.le.s32.totalorder %v340, 3
        %vm1526 = vmand %vm521, %vm1522
        %vm1527 = vmand %vm522, %vm1523
        %vm1528 = vmand %vm523, %vm1524
        %vm1529 = vmand %vm524, %vm1525
        %v1530 = vsel %vm1526, %v1504, 0.0
        %v1531 = vsel %vm1527, %v1509, 0.0
        %v1532 = vsel %vm1528, %v1514, 0.0
        %v1533 = vsel %vm1529, %v1519, 0.0
        %1534 = vst.msk [vmem:[#allocation2 + $0x1] sm:$0xff] %vm341, %v1530
        %1535 = vst.msk [vmem:[#allocation2 + $0x9] sm:$0xff] %vm341, %v1531
        %1536 = vst.msk [vmem:[#allocation2 + $0x11] sm:$0xff] %vm341, %v1532
        %1537 = vst.msk [vmem:[#allocation2 + $0x19] sm:$0xff] %vm341, %v1533
        %v1538 = vld [vmem:[#allocation2] sm:$0xff]
        %v1539 = vld [vmem:[#allocation2 + $0x8] sm:$0xff]
        %v1540 = vld [vmem:[#allocation2 + $0x10] sm:$0xff]
        %v1541 = vld [vmem:[#allocation2 + $0x18] sm:$0xff]
        %v1542 = vld [vmem:[#allocation2 + $0x20] sm:$0x3]
        %v1543 = vmax.f32 %v1538, 0.0
        %v1544 = vmax.f32 %v1539, 0.0
        %v1545 = vmax.f32 %v1540, 0.0
        %v1546 = vmax.f32 %v1541, 0.0
        %v1547 = vmax.f32 %v1542, 0.0
        %v1553 = vrot.slane %v1543, 1
        %v1554 = vrot.slane %v1544, 1
        %v1555 = vsel %vm355, %v1553, %v1554
        %v1556 = vrot.slane %v1545, 1
        %v1557 = vsel %vm355, %v1554, %v1556
        %v1558 = vrot.slane %v1546, 1
        %v1559 = vsel %vm355, %v1556, %v1558
        %v1560 = vrot.slane %v1547, 1
        %v1561 = vsel %vm355, %v1558, %v1560
        %1562 = vrot.lane.b32.xlu0 %v1555, 32
        %v1563 = vpop.permute.xlu0 %1562
        %1564 = vrot.lane.b32.xlu0 %v1557, 32
        %v1565 = vpop.permute.xlu0 %1564
        %1566 = vrot.lane.b32.xlu0 %v1559, 32
        %v1567 = vpop.permute.xlu0 %1566
        %1568 = vrot.lane.b32.xlu0 %v1561, 32
        %v1569 = vpop.permute.xlu0 %1568
        %v1574 = vrot.slane %v1543, 2
        %v1575 = vrot.slane %v1544, 2
        %v1576 = vsel %vm375, %v1574, %v1575
        %v1577 = vrot.slane %v1545, 2
        %v1578 = vsel %vm375, %v1575, %v1577
        %v1579 = vrot.slane %v1546, 2
        %v1580 = vsel %vm375, %v1577, %v1579
        %v1581 = vrot.slane %v1547, 2
        %v1582 = vsel %vm375, %v1579, %v1581
        %1583 = vrot.lane.b32.xlu0 %v1576, 64
        %v1584 = vpop.permute.xlu0 %1583
        %1585 = vrot.lane.b32.xlu0 %v1578, 64
        %v1586 = vpop.permute.xlu0 %1585
        %1587 = vrot.lane.b32.xlu0 %v1580, 64
        %v1588 = vpop.permute.xlu0 %1587
        %1589 = vrot.lane.b32.xlu0 %v1582, 64
        %v1590 = vpop.permute.xlu0 %1589
        %v1595 = vsel %vm341, %v1543, %v1563
        %v1596 = vsel %vm341, %v1544, %v1565
        %v1597 = vsel %vm341, %v1545, %v1567
        %v1598 = vsel %vm341, %v1546, %v1569
        %v1599 = vsel %vm399, %v1595, %v1584
        %v1600 = vsel %vm399, %v1596, %v1586
        %v1601 = vsel %vm399, %v1597, %v1588
        %v1602 = vsel %vm399, %v1598, %v1590
        %v1603 = vld [vmem:[%s3] sm:$0xff]
        %v1604 = vld [vmem:[%s3 + $0x8] sm:$0xff]
        %v1605 = vld [vmem:[%s3 + $0x10] sm:$0xff]
        %v1606 = vld [vmem:[%s3 + $0x18] sm:$0xff]
        %v1607 = vld [vmem:[%s3 + $0x20] sm:$0xff]
        %v1608 = vld [vmem:[%s3 + $0x28] sm:$0xff]
        %v1609 = vld [vmem:[%s3 + $0x30] sm:$0xff]
        %v1610 = vld [vmem:[%s3 + $0x38] sm:$0xff]
        %v1611 = vld [vmem:[%s3 + $0x40] sm:$0xff]
        %v1612 = vld [vmem:[%s3 + $0x48] sm:$0xff]
        %v1613 = vld [vmem:[%s3 + $0x50] sm:$0xff]
        %v1614 = vld [vmem:[%s3 + $0x58] sm:$0xff]
        %v1616 = vsel %vm423, %v1599, 0
        %v1619 = vsel %vm423, %v1600, 0
        %v1622 = vsel %vm423, %v1601, 0
        %v1625 = vsel %vm423, %v1602, 0
        %1627 = vmatprep.subr.mxu0 0.0
        %1628 = vmatpush1.msra.mxu0 0.0
        %1629 = vmatprep.subr.mxu0 0.0
        %1630 = vmatpush1.msra.mxu0 0.0
        %1631 = vmatprep.subr.mxu0 0.0
        %1632 = vmatpush1.msra.mxu0 0.0
        %1633 = vmatprep.subr.mxu0 0.0
        %1634 = vmatpush1.msra.mxu0 0.0
        %1635 = vmatprep.subr.mxu0 0.0
        %1636 = vmatpush1.msra.mxu0 %v1614
        %1637 = vmatprep.subr.mxu0 0.0
        %1638 = vmatpush1.msra.mxu0 %v1613
        %1639 = vmatprep.subr.mxu0 0.0
        %1640 = vmatpush1.msra.mxu0 %v1612
        %1641 = vmatprep.subr.mxu0 0.0
        %1642 = vmatpush1.msra.mxu0 %v1611
        %1643 = vmatprep.subr.mxu0 0.0
        %1644 = vmatpush1.msra.mxu0 %v1610
        %1645 = vmatprep.subr.mxu0 0.0
        %1646 = vmatpush1.msra.mxu0 %v1609
        %1647 = vmatprep.subr.mxu0 0.0
        %1648 = vmatpush1.msra.mxu0 %v1608
        %1649 = vmatprep.subr.mxu0 0.0
        %1650 = vmatpush1.msra.mxu0 %v1607
        %1651 = vmatprep.subr.mxu0 0.0
        %1652 = vmatpush1.msra.mxu0 %v1606
        %1653 = vmatprep.subr.mxu0 0.0
        %1654 = vmatpush1.msra.mxu0 %v1605
        %1655 = vmatprep.subr.mxu0 0.0
        %1656 = vmatpush1.msra.mxu0 %v1604
        %1657 = vmatprep.subr.mxu0 0.0
        %1658 = vmatpush1.msra.mxu0 %v1603
        %1659 = vmatprep.subr.mxu0 0.0
        %1660 = vmatpush2.msra.mxu0 0.0
        %1661 = vmatprep.subr.mxu0 0.0
        %1662 = vmatpush2.msra.mxu0 0.0
        %1663 = vmatprep.subr.mxu0 0.0
        %1664 = vmatpush2.msra.mxu0 0.0
        %1665 = vmatprep.subr.mxu0 0.0
        %1666 = vmatpush2.msra.mxu0 0.0
        %1667 = vmatprep.subr.mxu0 0.0
        %1668 = vmatpush2.msra.mxu0 0.0
        %1669 = vmatprep.subr.mxu0 0.0
        %1670 = vmatpush2.msra.mxu0 0.0
        %1671 = vmatprep.subr.mxu0 0.0
        %1672 = vmatpush2.msra.mxu0 0.0
        %1673 = vmatprep.subr.mxu0 0.0
        %1674 = vmatpush2.msra.mxu0 0.0
        %1675 = vmatprep.subr.mxu0 0.0
        %1676 = vmatpush2.msra.mxu0 0.0
        %1677 = vmatprep.subr.mxu0 0.0
        %1678 = vmatpush2.msra.mxu0 0.0
        %1679 = vmatprep.subr.mxu0 0.0
        %1680 = vmatpush2.msra.mxu0 0.0
        %1681 = vmatprep.subr.mxu0 0.0
        %1682 = vmatpush2.msra.mxu0 0.0
        %1683 = vmatprep.subr.mxu0 0.0
        %1684 = vmatpush2.msra.mxu0 0.0
        %1685 = vmatprep.subr.mxu0 0.0
        %1686 = vmatpush2.msra.mxu0 0.0
        %1687 = vmatprep.subr.mxu0 0.0
        %1688 = vmatpush2.msra.mxu0 0.0
        %1689 = vmatprep.subr.mxu0 0.0
        %1690 = vmatpush2.msra.mxu0 0.0
        %1691 = vmatprep.mubr.f32.mxu0 0.0
        %1692 = vmatmul.mubr.f32.gmra.mxu0 %v1616
        %v1693 = vpop.f32.mrf.mxu0
        %v1694 = vadd.f32 %v282, %v1693
        %v1695 = vpop.f32.mrf.mxu0
        %1696 = vmatprep.mubr.f32.mxu0 0.0
        %1697 = vmatmul.mubr.f32.gmra.mxu0 %v1619
        %v1698 = vpop.f32.mrf.mxu0
        %v1699 = vadd.f32 %v282, %v1698
        %v1700 = vpop.f32.mrf.mxu0
        %1701 = vmatprep.mubr.f32.mxu0 0.0
        %1702 = vmatmul.mubr.f32.gmra.mxu0 %v1622
        %v1703 = vpop.f32.mrf.mxu0
        %v1704 = vadd.f32 %v282, %v1703
        %v1705 = vpop.f32.mrf.mxu0
        %1706 = vmatprep.mubr.f32.mxu0 0.0
        %1707 = vmatmul.mubr.f32.gmra.mxu0 %v1625
        %v1708 = vpop.f32.mrf.mxu0
        %v1709 = vadd.f32 %v282, %v1708
        %v1710 = vpop.f32.mrf.mxu0
        %1711 = vdwg.mxu0
        %v1712 = vsel %vm1526, %v1694, 0.0
        %v1713 = vsel %vm1527, %v1699, 0.0
        %v1714 = vsel %vm1528, %v1704, 0.0
        %v1715 = vsel %vm1529, %v1709, 0.0
        %v1716 = vld [vmem:[#allocation3 + $0x1] sm:$0xff]
        %v1717 = vld [vmem:[#allocation3 + $0x9] sm:$0xff]
        %v1718 = vld [vmem:[#allocation3 + $0x11] sm:$0xff]
        %v1719 = vld [vmem:[#allocation3 + $0x19] sm:$0xff]
        %v1720 = vadd.f32 %v1712, %v1716
        %v1721 = vadd.f32 %v1713, %v1717
        %v1722 = vadd.f32 %v1714, %v1718
        %v1723 = vadd.f32 %v1715, %v1719
        %1724 = vst.msk [vmem:[#allocation2 + $0x1] sm:$0xff] %vm341, %v1720
        %1725 = vst.msk [vmem:[#allocation2 + $0x9] sm:$0xff] %vm341, %v1721
        %1726 = vst.msk [vmem:[#allocation2 + $0x11] sm:$0xff] %vm341, %v1722
        %1727 = vst.msk [vmem:[#allocation2 + $0x19] sm:$0xff] %vm341, %v1723
        %v1728 = vld [vmem:[%s906] ss:$2 sm:$0x1]
        %v1729 = vld [vmem:[%s908] ss:$2 sm:$0x1]
        %v1730 = vld [vmem:[%s910] ss:$2 sm:$0x1]
        %v1731 = vmax.f32 %v1728, %v1729
        %v1732 = vmax.f32 %v1731, %v1730
        %v1733 = vld [vmem:[%s914] ss:$2 sm:$0x1]
        %v1734 = vld [vmem:[%s916] ss:$2 sm:$0x1]
        %v1735 = vld [vmem:[%s918] ss:$2 sm:$0x1]
        %v1736 = vmax.f32 %v1733, %v1734
        %v1737 = vmax.f32 %v1736, %v1735
        %1738 = vst.msk [vmem:[#allocation2] sm:$0xff] %vm341, 0.0
        %1739 = vst.msk [vmem:[#allocation2 + $0x8] sm:$0xff] %vm341, 0.0
        %1740 = vst.msk [vmem:[#allocation2 + $0x10] sm:$0xff] %vm341, 0.0
        %1741 = vst.msk [vmem:[#allocation2 + $0x18] sm:$0xff] %vm341, 0.0
        %1742 = vst.msk [vmem:[#allocation2 + $0x20] sm:$0xff] %vm341, 0.0
        %vm1743 = vcmask 253952
        %1744 = vst.msk [vmem:[#allocation2 + $0x1] sm:$0x1] %vm1743, %v1732
        %1745 = vst.msk [vmem:[#allocation2 + $0x11] sm:$0x1] %vm1743, %v1737
        %v1746 = vld [vmem:[#allocation2] sm:$0xff]
        %v1747 = vld [vmem:[#allocation2 + $0x8] sm:$0xff]
        %v1748 = vld [vmem:[#allocation2 + $0x10] sm:$0xff]
        %v1749 = vld [vmem:[#allocation2 + $0x18] sm:$0xff]
        %v1750 = vld [vmem:[#allocation2 + $0x20] sm:$0xff]
        %1751 = vst.msk [vmem:[#allocation3] sm:$0xff] %vm341, %v1746
        %1752 = vst.msk [vmem:[#allocation3 + $0x8] sm:$0xff] %vm341, %v1747
        %1753 = vst.msk [vmem:[#allocation3 + $0x10] sm:$0xff] %vm341, %v1748
        %1754 = vst.msk [vmem:[#allocation3 + $0x18] sm:$0xff] %vm341, %v1749
        %1755 = vst.msk [vmem:[#allocation3 + $0x20] sm:$0xff] %vm341, %v1750
        %v1756 = vld [vmem:[#allocation2] sm:$0xff]
        %v1757 = vld [vmem:[#allocation2 + $0x8] sm:$0xff]
        %v1758 = vld [vmem:[#allocation2 + $0x10] sm:$0xff]
        %v1759 = vld [vmem:[#allocation2 + $0x18] sm:$0xff]
        %v1760 = vld [vmem:[#allocation2 + $0x20] sm:$0x3]
        %v1761 = vmax.f32 %v1756, 0.0
        %v1762 = vmax.f32 %v1757, 0.0
        %v1763 = vmax.f32 %v1758, 0.0
        %v1764 = vmax.f32 %v1759, 0.0
        %v1765 = vmax.f32 %v1760, 0.0
        %v1771 = vrot.slane %v1761, 1
        %v1772 = vrot.slane %v1762, 1
        %v1773 = vsel %vm355, %v1771, %v1772
        %v1774 = vrot.slane %v1763, 1
        %v1775 = vsel %vm355, %v1772, %v1774
        %v1776 = vrot.slane %v1764, 1
        %v1777 = vsel %vm355, %v1774, %v1776
        %v1778 = vrot.slane %v1765, 1
        %v1779 = vsel %vm355, %v1776, %v1778
        %1780 = vrot.lane.b32.xlu0 %v1773, 32
        %v1781 = vpop.permute.xlu0 %1780
        %1782 = vrot.lane.b32.xlu0 %v1775, 32
        %v1783 = vpop.permute.xlu0 %1782
        %1784 = vrot.lane.b32.xlu0 %v1777, 32
        %v1785 = vpop.permute.xlu0 %1784
        %1786 = vrot.lane.b32.xlu0 %v1779, 32
        %v1787 = vpop.permute.xlu0 %1786
        %v1792 = vrot.slane %v1761, 2
        %v1793 = vrot.slane %v1762, 2
        %v1794 = vsel %vm375, %v1792, %v1793
        %v1795 = vrot.slane %v1763, 2
        %v1796 = vsel %vm375, %v1793, %v1795
        %v1797 = vrot.slane %v1764, 2
        %v1798 = vsel %vm375, %v1795, %v1797
        %v1799 = vrot.slane %v1765, 2
        %v1800 = vsel %vm375, %v1797, %v1799
        %1801 = vrot.lane.b32.xlu0 %v1794, 64
        %v1802 = vpop.permute.xlu0 %1801
        %1803 = vrot.lane.b32.xlu0 %v1796, 64
        %v1804 = vpop.permute.xlu0 %1803
        %1805 = vrot.lane.b32.xlu0 %v1798, 64
        %v1806 = vpop.permute.xlu0 %1805
        %1807 = vrot.lane.b32.xlu0 %v1800, 64
        %v1808 = vpop.permute.xlu0 %1807
        %v1813 = vsel %vm341, %v1761, %v1781
        %v1814 = vsel %vm341, %v1762, %v1783
        %v1815 = vsel %vm341, %v1763, %v1785
        %v1816 = vsel %vm341, %v1764, %v1787
        %v1817 = vsel %vm399, %v1813, %v1802
        %v1818 = vsel %vm399, %v1814, %v1804
        %v1819 = vsel %vm399, %v1815, %v1806
        %v1820 = vsel %vm399, %v1816, %v1808
        %v1821 = vld [vmem:[%s3] sm:$0xff]
        %v1822 = vld [vmem:[%s3 + $0x8] sm:$0xff]
        %v1823 = vld [vmem:[%s3 + $0x10] sm:$0xff]
        %v1824 = vld [vmem:[%s3 + $0x18] sm:$0xff]
        %v1825 = vld [vmem:[%s3 + $0x20] sm:$0xff]
        %v1826 = vld [vmem:[%s3 + $0x28] sm:$0xff]
        %v1827 = vld [vmem:[%s3 + $0x30] sm:$0xff]
        %v1828 = vld [vmem:[%s3 + $0x38] sm:$0xff]
        %v1829 = vld [vmem:[%s3 + $0x40] sm:$0xff]
        %v1830 = vld [vmem:[%s3 + $0x48] sm:$0xff]
        %v1831 = vld [vmem:[%s3 + $0x50] sm:$0xff]
        %v1832 = vld [vmem:[%s3 + $0x58] sm:$0xff]
        %v1834 = vsel %vm423, %v1817, 0
        %v1837 = vsel %vm423, %v1818, 0
        %v1840 = vsel %vm423, %v1819, 0
        %v1843 = vsel %vm423, %v1820, 0
        %1845 = vmatprep.subr.mxu0 0.0
        %1846 = vmatpush1.msra.mxu0 0.0
        %1847 = vmatprep.subr.mxu0 0.0
        %1848 = vmatpush1.msra.mxu0 0.0
        %1849 = vmatprep.subr.mxu0 0.0
        %1850 = vmatpush1.msra.mxu0 0.0
        %1851 = vmatprep.subr.mxu0 0.0
        %1852 = vmatpush1.msra.mxu0 0.0
        %1853 = vmatprep.subr.mxu0 0.0
        %1854 = vmatpush1.msra.mxu0 %v1832
        %1855 = vmatprep.subr.mxu0 0.0
        %1856 = vmatpush1.msra.mxu0 %v1831
        %1857 = vmatprep.subr.mxu0 0.0
        %1858 = vmatpush1.msra.mxu0 %v1830
        %1859 = vmatprep.subr.mxu0 0.0
        %1860 = vmatpush1.msra.mxu0 %v1829
        %1861 = vmatprep.subr.mxu0 0.0
        %1862 = vmatpush1.msra.mxu0 %v1828
        %1863 = vmatprep.subr.mxu0 0.0
        %1864 = vmatpush1.msra.mxu0 %v1827
        %1865 = vmatprep.subr.mxu0 0.0
        %1866 = vmatpush1.msra.mxu0 %v1826
        %1867 = vmatprep.subr.mxu0 0.0
        %1868 = vmatpush1.msra.mxu0 %v1825
        %1869 = vmatprep.subr.mxu0 0.0
        %1870 = vmatpush1.msra.mxu0 %v1824
        %1871 = vmatprep.subr.mxu0 0.0
        %1872 = vmatpush1.msra.mxu0 %v1823
        %1873 = vmatprep.subr.mxu0 0.0
        %1874 = vmatpush1.msra.mxu0 %v1822
        %1875 = vmatprep.subr.mxu0 0.0
        %1876 = vmatpush1.msra.mxu0 %v1821
        %1877 = vmatprep.subr.mxu0 0.0
        %1878 = vmatpush2.msra.mxu0 0.0
        %1879 = vmatprep.subr.mxu0 0.0
        %1880 = vmatpush2.msra.mxu0 0.0
        %1881 = vmatprep.subr.mxu0 0.0
        %1882 = vmatpush2.msra.mxu0 0.0
        %1883 = vmatprep.subr.mxu0 0.0
        %1884 = vmatpush2.msra.mxu0 0.0
        %1885 = vmatprep.subr.mxu0 0.0
        %1886 = vmatpush2.msra.mxu0 0.0
        %1887 = vmatprep.subr.mxu0 0.0
        %1888 = vmatpush2.msra.mxu0 0.0
        %1889 = vmatprep.subr.mxu0 0.0
        %1890 = vmatpush2.msra.mxu0 0.0
        %1891 = vmatprep.subr.mxu0 0.0
        %1892 = vmatpush2.msra.mxu0 0.0
        %1893 = vmatprep.subr.mxu0 0.0
        %1894 = vmatpush2.msra.mxu0 0.0
        %1895 = vmatprep.subr.mxu0 0.0
        %1896 = vmatpush2.msra.mxu0 0.0
        %1897 = vmatprep.subr.mxu0 0.0
        %1898 = vmatpush2.msra.mxu0 0.0
        %1899 = vmatprep.subr.mxu0 0.0
        %1900 = vmatpush2.msra.mxu0 0.0
        %1901 = vmatprep.subr.mxu0 0.0
        %1902 = vmatpush2.msra.mxu0 0.0
        %1903 = vmatprep.subr.mxu0 0.0
        %1904 = vmatpush2.msra.mxu0 0.0
        %1905 = vmatprep.subr.mxu0 0.0
        %1906 = vmatpush2.msra.mxu0 0.0
        %1907 = vmatprep.subr.mxu0 0.0
        %1908 = vmatpush2.msra.mxu0 0.0
        %1909 = vmatprep.mubr.f32.mxu0 0.0
        %1910 = vmatmul.mubr.f32.gmra.mxu0 %v1834
        %v1911 = vpop.f32.mrf.mxu0
        %v1912 = vadd.f32 %v282, %v1911
        %v1913 = vpop.f32.mrf.mxu0
        %1914 = vmatprep.mubr.f32.mxu0 0.0
        %1915 = vmatmul.mubr.f32.gmra.mxu0 %v1837
        %v1916 = vpop.f32.mrf.mxu0
        %v1917 = vadd.f32 %v282, %v1916
        %v1918 = vpop.f32.mrf.mxu0
        %1919 = vmatprep.mubr.f32.mxu0 0.0
        %1920 = vmatmul.mubr.f32.gmra.mxu0 %v1840
        %v1921 = vpop.f32.mrf.mxu0
        %v1922 = vadd.f32 %v282, %v1921
        %v1923 = vpop.f32.mrf.mxu0
        %1924 = vmatprep.mubr.f32.mxu0 0.0
        %1925 = vmatmul.mubr.f32.gmra.mxu0 %v1843
        %v1926 = vpop.f32.mrf.mxu0
        %v1927 = vadd.f32 %v282, %v1926
        %v1928 = vpop.f32.mrf.mxu0
        %1929 = vdwg.mxu0
        %vm1930 = vcmp.le.s32.totalorder %v337, 1
        %vm1931 = vcmp.le.s32.totalorder %v338, 1
        %vm1932 = vcmp.le.s32.totalorder %v339, 1
        %vm1933 = vcmp.le.s32.totalorder %v340, 1
        %vm1934 = vmand %vm521, %vm1930
        %vm1935 = vmand %vm522, %vm1931
        %vm1936 = vmand %vm523, %vm1932
        %vm1937 = vmand %vm524, %vm1933
        %v1938 = vsel %vm1934, %v1912, 0.0
        %v1939 = vsel %vm1935, %v1917, 0.0
        %v1940 = vsel %vm1936, %v1922, 0.0
        %v1941 = vsel %vm1937, %v1927, 0.0
        %1942 = vst.msk [vmem:[#allocation2 + $0x1] sm:$0xff] %vm341, %v1938
        %1943 = vst.msk [vmem:[#allocation2 + $0x9] sm:$0xff] %vm341, %v1939
        %1944 = vst.msk [vmem:[#allocation2 + $0x11] sm:$0xff] %vm341, %v1940
        %1945 = vst.msk [vmem:[#allocation2 + $0x19] sm:$0xff] %vm341, %v1941
        %v1946 = vld [vmem:[#allocation2] sm:$0xff]
        %v1947 = vld [vmem:[#allocation2 + $0x8] sm:$0xff]
        %v1948 = vld [vmem:[#allocation2 + $0x10] sm:$0xff]
        %v1949 = vld [vmem:[#allocation2 + $0x18] sm:$0xff]
        %v1950 = vld [vmem:[#allocation2 + $0x20] sm:$0x3]
        %v1951 = vmax.f32 %v1946, 0.0
        %v1952 = vmax.f32 %v1947, 0.0
        %v1953 = vmax.f32 %v1948, 0.0
        %v1954 = vmax.f32 %v1949, 0.0
        %v1955 = vmax.f32 %v1950, 0.0
        %v1961 = vrot.slane %v1951, 1
        %v1962 = vrot.slane %v1952, 1
        %v1963 = vsel %vm355, %v1961, %v1962
        %v1964 = vrot.slane %v1953, 1
        %v1965 = vsel %vm355, %v1962, %v1964
        %v1966 = vrot.slane %v1954, 1
        %v1967 = vsel %vm355, %v1964, %v1966
        %v1968 = vrot.slane %v1955, 1
        %v1969 = vsel %vm355, %v1966, %v1968
        %1970 = vrot.lane.b32.xlu0 %v1963, 32
        %v1971 = vpop.permute.xlu0 %1970
        %1972 = vrot.lane.b32.xlu0 %v1965, 32
        %v1973 = vpop.permute.xlu0 %1972
        %1974 = vrot.lane.b32.xlu0 %v1967, 32
        %v1975 = vpop.permute.xlu0 %1974
        %1976 = vrot.lane.b32.xlu0 %v1969, 32
        %v1977 = vpop.permute.xlu0 %1976
        %v1982 = vrot.slane %v1951, 2
        %v1983 = vrot.slane %v1952, 2
        %v1984 = vsel %vm375, %v1982, %v1983
        %v1985 = vrot.slane %v1953, 2
        %v1986 = vsel %vm375, %v1983, %v1985
        %v1987 = vrot.slane %v1954, 2
        %v1988 = vsel %vm375, %v1985, %v1987
        %v1989 = vrot.slane %v1955, 2
        %v1990 = vsel %vm375, %v1987, %v1989
        %1991 = vrot.lane.b32.xlu0 %v1984, 64
        %v1992 = vpop.permute.xlu0 %1991
        %1993 = vrot.lane.b32.xlu0 %v1986, 64
        %v1994 = vpop.permute.xlu0 %1993
        %1995 = vrot.lane.b32.xlu0 %v1988, 64
        %v1996 = vpop.permute.xlu0 %1995
        %1997 = vrot.lane.b32.xlu0 %v1990, 64
        %v1998 = vpop.permute.xlu0 %1997
        %v2003 = vsel %vm341, %v1951, %v1971
        %v2004 = vsel %vm341, %v1952, %v1973
        %v2005 = vsel %vm341, %v1953, %v1975
        %v2006 = vsel %vm341, %v1954, %v1977
        %v2007 = vsel %vm399, %v2003, %v1992
        %v2008 = vsel %vm399, %v2004, %v1994
        %v2009 = vsel %vm399, %v2005, %v1996
        %v2010 = vsel %vm399, %v2006, %v1998
        %v2011 = vld [vmem:[%s3] sm:$0xff]
        %v2012 = vld [vmem:[%s3 + $0x8] sm:$0xff]
        %v2013 = vld [vmem:[%s3 + $0x10] sm:$0xff]
        %v2014 = vld [vmem:[%s3 + $0x18] sm:$0xff]
        %v2015 = vld [vmem:[%s3 + $0x20] sm:$0xff]
        %v2016 = vld [vmem:[%s3 + $0x28] sm:$0xff]
        %v2017 = vld [vmem:[%s3 + $0x30] sm:$0xff]
        %v2018 = vld [vmem:[%s3 + $0x38] sm:$0xff]
        %v2019 = vld [vmem:[%s3 + $0x40] sm:$0xff]
        %v2020 = vld [vmem:[%s3 + $0x48] sm:$0xff]
        %v2021 = vld [vmem:[%s3 + $0x50] sm:$0xff]
        %v2022 = vld [vmem:[%s3 + $0x58] sm:$0xff]
        %v2024 = vsel %vm423, %v2007, 0
        %v2027 = vsel %vm423, %v2008, 0
        %v2030 = vsel %vm423, %v2009, 0
        %v2033 = vsel %vm423, %v2010, 0
        %2035 = vmatprep.subr.mxu0 0.0
        %2036 = vmatpush1.msra.mxu0 0.0
        %2037 = vmatprep.subr.mxu0 0.0
        %2038 = vmatpush1.msra.mxu0 0.0
        %2039 = vmatprep.subr.mxu0 0.0
        %2040 = vmatpush1.msra.mxu0 0.0
        %2041 = vmatprep.subr.mxu0 0.0
        %2042 = vmatpush1.msra.mxu0 0.0
        %2043 = vmatprep.subr.mxu0 0.0
        %2044 = vmatpush1.msra.mxu0 %v2022
        %2045 = vmatprep.subr.mxu0 0.0
        %2046 = vmatpush1.msra.mxu0 %v2021
        %2047 = vmatprep.subr.mxu0 0.0
        %2048 = vmatpush1.msra.mxu0 %v2020
        %2049 = vmatprep.subr.mxu0 0.0
        %2050 = vmatpush1.msra.mxu0 %v2019
        %2051 = vmatprep.subr.mxu0 0.0
        %2052 = vmatpush1.msra.mxu0 %v2018
        %2053 = vmatprep.subr.mxu0 0.0
        %2054 = vmatpush1.msra.mxu0 %v2017
        %2055 = vmatprep.subr.mxu0 0.0
        %2056 = vmatpush1.msra.mxu0 %v2016
        %2057 = vmatprep.subr.mxu0 0.0
        %2058 = vmatpush1.msra.mxu0 %v2015
        %2059 = vmatprep.subr.mxu0 0.0
        %2060 = vmatpush1.msra.mxu0 %v2014
        %2061 = vmatprep.subr.mxu0 0.0
        %2062 = vmatpush1.msra.mxu0 %v2013
        %2063 = vmatprep.subr.mxu0 0.0
        %2064 = vmatpush1.msra.mxu0 %v2012
        %2065 = vmatprep.subr.mxu0 0.0
        %2066 = vmatpush1.msra.mxu0 %v2011
        %2067 = vmatprep.subr.mxu0 0.0
        %2068 = vmatpush2.msra.mxu0 0.0
        %2069 = vmatprep.subr.mxu0 0.0
        %2070 = vmatpush2.msra.mxu0 0.0
        %2071 = vmatprep.subr.mxu0 0.0
        %2072 = vmatpush2.msra.mxu0 0.0
        %2073 = vmatprep.subr.mxu0 0.0
        %2074 = vmatpush2.msra.mxu0 0.0
        %2075 = vmatprep.subr.mxu0 0.0
        %2076 = vmatpush2.msra.mxu0 0.0
        %2077 = vmatprep.subr.mxu0 0.0
        %2078 = vmatpush2.msra.mxu0 0.0
        %2079 = vmatprep.subr.mxu0 0.0
        %2080 = vmatpush2.msra.mxu0 0.0
        %2081 = vmatprep.subr.mxu0 0.0
        %2082 = vmatpush2.msra.mxu0 0.0
        %2083 = vmatprep.subr.mxu0 0.0
        %2084 = vmatpush2.msra.mxu0 0.0
        %2085 = vmatprep.subr.mxu0 0.0
        %2086 = vmatpush2.msra.mxu0 0.0
        %2087 = vmatprep.subr.mxu0 0.0
        %2088 = vmatpush2.msra.mxu0 0.0
        %2089 = vmatprep.subr.mxu0 0.0
        %2090 = vmatpush2.msra.mxu0 0.0
        %2091 = vmatprep.subr.mxu0 0.0
        %2092 = vmatpush2.msra.mxu0 0.0
        %2093 = vmatprep.subr.mxu0 0.0
        %2094 = vmatpush2.msra.mxu0 0.0
        %2095 = vmatprep.subr.mxu0 0.0
        %2096 = vmatpush2.msra.mxu0 0.0
        %2097 = vmatprep.subr.mxu0 0.0
        %2098 = vmatpush2.msra.mxu0 0.0
        %2099 = vmatprep.mubr.f32.mxu0 0.0
        %2100 = vmatmul.mubr.f32.gmra.mxu0 %v2024
        %v2101 = vpop.f32.mrf.mxu0
        %v2102 = vadd.f32 %v282, %v2101
        %v2103 = vpop.f32.mrf.mxu0
        %2104 = vmatprep.mubr.f32.mxu0 0.0
        %2105 = vmatmul.mubr.f32.gmra.mxu0 %v2027
        %v2106 = vpop.f32.mrf.mxu0
        %v2107 = vadd.f32 %v282, %v2106
        %v2108 = vpop.f32.mrf.mxu0
        %2109 = vmatprep.mubr.f32.mxu0 0.0
        %2110 = vmatmul.mubr.f32.gmra.mxu0 %v2030
        %v2111 = vpop.f32.mrf.mxu0
        %v2112 = vadd.f32 %v282, %v2111
        %v2113 = vpop.f32.mrf.mxu0
        %2114 = vmatprep.mubr.f32.mxu0 0.0
        %2115 = vmatmul.mubr.f32.gmra.mxu0 %v2033
        %v2116 = vpop.f32.mrf.mxu0
        %v2117 = vadd.f32 %v282, %v2116
        %v2118 = vpop.f32.mrf.mxu0
        %2119 = vdwg.mxu0
        %v2120 = vsel %vm1934, %v2102, 0.0
        %v2121 = vsel %vm1935, %v2107, 0.0
        %v2122 = vsel %vm1936, %v2112, 0.0
        %v2123 = vsel %vm1937, %v2117, 0.0
        %v2124 = vld [vmem:[#allocation3 + $0x1] sm:$0xff]
        %v2125 = vld [vmem:[#allocation3 + $0x9] sm:$0xff]
        %v2126 = vld [vmem:[#allocation3 + $0x11] sm:$0xff]
        %v2127 = vld [vmem:[#allocation3 + $0x19] sm:$0xff]
        %v2128 = vadd.f32 %v2120, %v2124
        %v2129 = vadd.f32 %v2121, %v2125
        %v2130 = vadd.f32 %v2122, %v2126
        %v2131 = vadd.f32 %v2123, %v2127
        %2132 = vst.msk [vmem:[#allocation2 + $0x1] sm:$0xff] %vm341, %v2128
        %2133 = vst.msk [vmem:[#allocation2 + $0x9] sm:$0xff] %vm341, %v2129
        %2134 = vst.msk [vmem:[#allocation2 + $0x11] sm:$0xff] %vm341, %v2130
        %2135 = vst.msk [vmem:[#allocation2 + $0x19] sm:$0xff] %vm341, %v2131
        %v2136 = vld [vmem:[%s906] ss:$16 sm:$0x3]
        %v2137 = vld [vmem:[%s5] sm:$0xff]
        %v2138 = vld [vmem:[%s5 + $0x8] sm:$0xff]
        %v2139 = vld [vmem:[%s5 + $0x10] sm:$0xff]
        %v2140 = vld [vmem:[%s5 + $0x18] sm:$0xff]
        %v2141 = vld [vmem:[%s6] sm:$0x1]
        %v2143 = vlaneseq
        %v2144 = vshrl.u32 %v2143, 7
        %v2145 = vsub.s32 0, %v2144
        %v2146 = vrot.slane %v2141, %v2145
        %v2149 = vsel %vm341, %v2136, 0
        %2151 = vmatprep.subr.mxu0 0.0
        %2152 = vmatpush1.msra.mxu0 0.0
        %2153 = vmatprep.subr.mxu0 0.0
        %2154 = vmatpush1.msra.mxu0 0.0
        %2155 = vmatprep.subr.mxu0 0.0
        %2156 = vmatpush1.msra.mxu0 0.0
        %2157 = vmatprep.subr.mxu0 0.0
        %2158 = vmatpush1.msra.mxu0 0.0
        %2159 = vmatprep.subr.mxu0 0.0
        %2160 = vmatpush1.msra.mxu0 0.0
        %2161 = vmatprep.subr.mxu0 0.0
        %2162 = vmatpush1.msra.mxu0 0.0
        %2163 = vmatprep.subr.mxu0 0.0
        %2164 = vmatpush1.msra.mxu0 0.0
        %2165 = vmatprep.subr.mxu0 0.0
        %2166 = vmatpush1.msra.mxu0 0.0
        %2167 = vmatprep.subr.mxu0 0.0
        %2168 = vmatpush1.msra.mxu0 0.0
        %2169 = vmatprep.subr.mxu0 0.0
        %2170 = vmatpush1.msra.mxu0 0.0
        %2171 = vmatprep.subr.mxu0 0.0
        %2172 = vmatpush1.msra.mxu0 0.0
        %2173 = vmatprep.subr.mxu0 0.0
        %2174 = vmatpush1.msra.mxu0 0.0
        %2175 = vmatprep.subr.mxu0 0.0
        %2176 = vmatpush1.msra.mxu0 %v2140
        %2177 = vmatprep.subr.mxu0 0.0
        %2178 = vmatpush1.msra.mxu0 %v2139
        %2179 = vmatprep.subr.mxu0 0.0
        %2180 = vmatpush1.msra.mxu0 %v2138
        %2181 = vmatprep.subr.mxu0 0.0
        %2182 = vmatpush1.msra.mxu0 %v2137
        %2183 = vmatprep.subr.mxu0 0.0
        %2184 = vmatpush2.msra.mxu0 0.0
        %2185 = vmatprep.subr.mxu0 0.0
        %2186 = vmatpush2.msra.mxu0 0.0
        %2187 = vmatprep.subr.mxu0 0.0
        %2188 = vmatpush2.msra.mxu0 0.0
        %2189 = vmatprep.subr.mxu0 0.0
        %2190 = vmatpush2.msra.mxu0 0.0
        %2191 = vmatprep.subr.mxu0 0.0
        %2192 = vmatpush2.msra.mxu0 0.0
        %2193 = vmatprep.subr.mxu0 0.0
        %2194 = vmatpush2.msra.mxu0 0.0
        %2195 = vmatprep.subr.mxu0 0.0
        %2196 = vmatpush2.msra.mxu0 0.0
        %2197 = vmatprep.subr.mxu0 0.0
        %2198 = vmatpush2.msra.mxu0 0.0
        %2199 = vmatprep.subr.mxu0 0.0
        %2200 = vmatpush2.msra.mxu0 0.0
        %2201 = vmatprep.subr.mxu0 0.0
        %2202 = vmatpush2.msra.mxu0 0.0
        %2203 = vmatprep.subr.mxu0 0.0
        %2204 = vmatpush2.msra.mxu0 0.0
        %2205 = vmatprep.subr.mxu0 0.0
        %2206 = vmatpush2.msra.mxu0 0.0
        %2207 = vmatprep.subr.mxu0 0.0
        %2208 = vmatpush2.msra.mxu0 0.0
        %2209 = vmatprep.subr.mxu0 0.0
        %2210 = vmatpush2.msra.mxu0 0.0
        %2211 = vmatprep.subr.mxu0 0.0
        %2212 = vmatpush2.msra.mxu0 0.0
        %2213 = vmatprep.subr.mxu0 0.0
        %2214 = vmatpush2.msra.mxu0 0.0
        %2215 = vmatprep.mubr.f32.mxu0 0.0
        %2216 = vmatmul.mubr.f32.gmra.mxu0 %v2149
        %v2217 = vpop.f32.mrf.mxu0
        %v2218 = vadd.f32 %v2146, %v2217
        %v2219 = vpop.f32.mrf.mxu0
        %2220 = vdwg.mxu0
        %2221 = vst [vmem:[%s271] sm:$0x3] %v2218
        %s2222 = sand.u32 %s181, 1
        %s2223 = scalar_lea.sflag [#allocation5], %s2222
        %s2224 = sand.u32 %s181, 1
        %s2225 = smul.addr %s2224, 2
        %s2226 = scalar_lea.vmem [#allocation4], %s2225
        // Predicated region
        $region49: #{tpu_custom_call.1} parent=47 // pred_check
          %p2227 = pneg %p191
        $region50: #{tpu_custom_call.1} parent=47 // pred_check_branch
          %2229 = sbr.rel (%p2227) target = $region52
        $region51: #{tpu_custom_call.1} parent=47 // pred_region
          %s2231 = ssub.s32 32, 32
          %2232 = vsyncadd %s2223, %s2231
          %s2233 = smul.addr %s21, 32
          %s2234 = scalar_lea.hbm %s7, %s2233
          %s2236 = sshll.u32 %s2226, 4
          %s2237 = int_to_ptr.vmem [resolvable:$true] %s2236
          %2239 = dma.vmem_to_hbm [thread:$0]  %s2237, 32, %s2234, %s2223
        $region52: #{tpu_custom_call.1} parent=47 // pred_fallthru
          _
      $region48: #{tpu_custom_call.1} parent=5 // pred_fallthru
        _
      %p2240 = scmp.le.s32.totalorder 2, %s16
      // Predicated region
      $region53: #{tpu_custom_call.1} parent=5 // pred_check
        %p2241 = pneg %p2240
      $region54: #{tpu_custom_call.1} parent=5 // pred_check_branch
        %2243 = sbr.rel (%p2241) target = $region56
      $region55: #{tpu_custom_call.1} parent=5 // pred_region
        %s2244 = ssub.s32 %s16, 2
        // Predicated region
        $region57: #{tpu_custom_call.1} parent=55 // pred_check
          %p2245 = pneg %p197
        $region58: #{tpu_custom_call.1} parent=55 // pred_check_branch
          %2247 = sbr.rel (%p2245) target = $region60
        $region59: #{tpu_custom_call.1} parent=55 // pred_region
          %s2248 = sand.u32 %s182, 1
          %s2249 = scalar_lea.sflag [#allocation5], %s2248
          %s2250 = sand.u32 %s182, 1
          %s2251 = smul.addr %s2250, 2
          %s2252 = scalar_lea.vmem [#allocation4], %s2251
          %2253 = dma.done %s2249, 32
        $region60: #{tpu_custom_call.1} parent=55 // pred_fallthru
          _
      $region56: #{tpu_custom_call.1} parent=5 // pred_fallthru
        _
    $region6: #{tpu_custom_call.1} parent=1 // loop_footer
      %s20 = sadd.s32 1, %s16
    $region7: #{tpu_custom_call.1} parent=1 // loop_footer_branch
      %15 = sbr.rel target = $region3
    $region8: #{tpu_custom_call.1} parent=1 // loop_exit
      _
    %2254 = vsyncpa [#allocation5], 1
    %s2255 = scalar_lea.sflag [#allocation5], 1
    %2256 = vsyncpa %s2255, 1

</llo_original>
